<compile_context>
chip_gen: v6e
topology: v6e:2x2x1
jax: 0.10.0
libtpu: 0.0.40
codegen_flags: <defaults>
</compile_context>

<pallas_src>
import functools
import math

import jax
import jax.numpy as jnp
from jax.experimental import pallas as pl
from jax.experimental.pallas import tpu as pltpu


_Q_ROW_TILE = 256                        # attention query-row tile target
_PROJ_ROW_TILE = 512                     # projection row-tile target (multiple of 8)
_PROJ_COL_TILE = 1024                    # projection column-tile target (multiple of 128)
_FUSED_QKV_WEIGHT_MAX_BYTES = 12 * 1024 * 1024  # fused-QKV path only if weight stays small
_MASK_VALUE = -1e30                      # additive mask value for padded KV columns

_vmem_limit_cache = None


def _vmem_limit_bytes():
    """Generation-aware scoped-VMEM budget (leaves headroom for double-buffering)."""
    global _vmem_limit_cache
    if _vmem_limit_cache is None:
        physical = 64 * 1024 * 1024          # safe fallback: v7x-sized VMEM
        try:
            physical = int(pltpu.get_tpu_info().vmem_capacity_bytes)
        except Exception:                    # older jax / info unavailable -> conservative
            pass
        _vmem_limit_cache = max(32 * 1024 * 1024, int(physical * 0.85))
    return _vmem_limit_cache


def _kv_tile_target():
    # Bigger KV tiles (better DMA hiding) on 128 MiB parts (v5e/v6e), smaller on v7x.
    return 1024 if _vmem_limit_bytes() >= 80 * 1024 * 1024 else 512


def _tile(dim, target, align):
    """Full extent when small (exempt from the (8,128) rule), else an aligned tile."""
    if dim <= target:
        return dim
    return max(align, (target // align) * align)


# ----------------------------------------------------------------------------
# Row + column tiled linear:  y = x @ w + b
# ----------------------------------------------------------------------------
def _linear_kernel(x_ref, w_ref, b_ref, o_ref):
    y = jnp.dot(x_ref[...], w_ref[...], preferred_element_type=jnp.float32)
    o_ref[...] = (y + b_ref[...]).astype(o_ref.dtype)


def linear(x, w, b, *, row_tile=_PROJ_ROW_TILE, col_tile=_PROJ_COL_TILE):
    """x: (M, K), w: (K, N) (already transposed vs. torch), b: (N,) -> (M, N)."""
    m, k = x.shape
    n = w.shape[1]
    tm = _tile(m, row_tile, 8)
    tn = _tile(n, col_tile, 128)
    # n axis outer: each weight column tile is DMA'd once; activations stream per n tile.
    grid = (pl.cdiv(n, tn), pl.cdiv(m, tm))
    return pl.pallas_call(
        _linear_kernel,
        out_shape=jax.ShapeDtypeStruct((m, n), x.dtype),
        grid=grid,
        in_specs=[
            pl.BlockSpec((tm, k), lambda j, i: (i, 0)),    # activations: streamed
            pl.BlockSpec((k, tn), lambda j, i: (0, j)),    # weight column tile (bounded VMEM)
            pl.BlockSpec((1, tn), lambda j, i: (0, j)),    # bias column tile
        ],
        out_specs=pl.BlockSpec((tm, tn), lambda j, i: (i, j)),   # lane-dense output block
        compiler_params=pltpu.CompilerParams(
            dimension_semantics=("parallel", "parallel"),
            vmem_limit_bytes=_vmem_limit_bytes()),
    )(x, w, b.reshape(1, n))


# ----------------------------------------------------------------------------
# Fused QKV projection (self-attention fast path, size-guarded resident weight)
# ----------------------------------------------------------------------------
def _qkv_proj_kernel(x_ref, w_ref, b_ref, q_ref, k_ref, v_ref, *, dq, dk):
    y = jnp.dot(x_ref[...], w_ref[...], preferred_element_type=jnp.float32) + b_ref[...]
    q_ref[...] = y[:, :dq].astype(q_ref.dtype)
    k_ref[...] = y[:, dq:dq + dk].astype(k_ref.dtype)
    v_ref[...] = y[:, dq + dk:].astype(v_ref.dtype)


def qkv_projection(x, w_qkv, b_qkv, dq, dk, dv, *, row_tile=_PROJ_ROW_TILE):
    """x: (M, D), w_qkv: (D, Dq+Dk+Dv) -> (q, k, v)."""
    m, kin = x.shape
    ntot = dq + dk + dv
    tm = _tile(m, row_tile, 8)
    kernel = functools.partial(_qkv_proj_kernel, dq=dq, dk=dk)
    return pl.pallas_call(
        kernel,
        out_shape=(
            jax.ShapeDtypeStruct((m, dq), x.dtype),
            jax.ShapeDtypeStruct((m, dk), x.dtype),
            jax.ShapeDtypeStruct((m, dv), x.dtype),
        ),
        grid=(pl.cdiv(m, tm),),
        in_specs=[
            pl.BlockSpec((tm, kin), lambda i: (i, 0)),
            pl.BlockSpec((kin, ntot), lambda i: (0, 0)),   # fused weight: resident (size-guarded)
            pl.BlockSpec((1, ntot), lambda i: (0, 0)),
        ],
        out_specs=(
            pl.BlockSpec((tm, dq), lambda i: (i, 0)),
            pl.BlockSpec((tm, dk), lambda i: (i, 0)),
            pl.BlockSpec((tm, dv), lambda i: (i, 0)),
        ),
        compiler_params=pltpu.CompilerParams(
            dimension_semantics=("parallel",),
            vmem_limit_bytes=_vmem_limit_bytes()),
    )(x, w_qkv, b_qkv.reshape(1, ntot))


# ----------------------------------------------------------------------------
# Flash attention: grid = (B, q_tiles, kv_tiles), online softmax in VMEM scratch.
# q/k/v stay in lane-dense (B, S, H*head) layout; heads sliced inside the kernel.
# ----------------------------------------------------------------------------
def _attn_kernel(*refs, num_heads, key_size, value_size, scale,
                 has_mask, mask_heads, kv_len, kv_tile):
    if has_mask:
        q_ref, k_ref, v_ref, mask_ref, o_ref, m_sc, l_sc, acc_sc = refs
    else:
        q_ref, k_ref, v_ref, o_ref, m_sc, l_sc, acc_sc = refs
        mask_ref = None

    ki = pl.program_id(2)
    nk = pl.num_programs(2)

    @pl.when(ki == 0)
    def _init():
        m_sc[...] = jnp.full(m_sc.shape, -jnp.inf, m_sc.dtype)
        l_sc[...] = jnp.zeros(l_sc.shape, l_sc.dtype)
        acc_sc[...] = jnp.zeros(acc_sc.shape, acc_sc.dtype)

    q = q_ref[0] * scale            # (tq, H*Dk): 1/sqrt(key_size) hoisted out of head loop
    k = k_ref[0]                    # (tk, H*Dk)
    v = v_ref[0]                    # (tk, H*Dv)

    needs_col_mask = (kv_len % kv_tile) != 0    # static: true only when KV was zero-padded
    if needs_col_mask:
        col_ok = (jax.lax.broadcasted_iota(jnp.int32, (1, kv_tile), 1)
                  + ki * kv_tile) < kv_len

    contract_last = (((1,), (1,)), ((), ()))    # A @ B^T on the last dims
    for h in range(num_heads):
        qh = q[:, h * key_size:(h + 1) * key_size]
        kh = k[:, h * key_size:(h + 1) * key_size]
        vh = v[:, h * value_size:(h + 1) * value_size]
        s = jax.lax.dot_general(qh, kh, contract_last,
                                preferred_element_type=jnp.float32)
        if mask_ref is not None:                # broadcast over batch / heads in-kernel
            s = s + mask_ref[0, h if mask_heads > 1 else 0].astype(jnp.float32)
        if needs_col_mask:
            s = jnp.where(col_ok, s, _MASK_VALUE)

        m_prev = m_sc[h]
        m_new = jnp.maximum(m_prev, jnp.max(s, axis=-1, keepdims=True))
        alpha = jnp.exp(m_prev - m_new)
        p = jnp.exp(s - m_new)
        l_sc[h, :, :] = alpha * l_sc[h] + jnp.sum(p, axis=-1, keepdims=True)
        acc_sc[h, :, :] = alpha * acc_sc[h] + jnp.dot(
            p.astype(vh.dtype), vh, preferred_element_type=jnp.float32)
        m_sc[h, :, :] = m_new

    @pl.when(ki == nk - 1)
    def _finalize():
        for h in range(num_heads):
            inv = pl.reciprocal(l_sc[h], approx=True)
            o_ref[0, h, :, :] = (acc_sc[h] * inv).astype(o_ref.dtype)


def _normalize_mask(mask, sq, sk):
    """Promote to 4D (1|B, 1|H, Sq, Sk) WITHOUT broadcasting batch/head dims in HBM."""
    m = jnp.asarray(mask)
    while m.ndim < 4:
        m = m[None]
    return jnp.broadcast_to(m, m.shape[:2] + (sq, sk))


def mha_attention(q, k, v, mask, *, num_heads, key_size, value_size,
                  q_tile=_Q_ROW_TILE):
    """q: (B, Sq, H*Dk), k: (B, Sk, H*Dk), v: (B, Sk, H*Dv),
    mask: None or additive, broadcastable to (B, H, Sq, Sk)  ->  (B, H, Sq, Dv)."""
    b, sq, dqt = q.shape
    sk = k.shape[1]
    dvt = v.shape[2]

    # Query-row tiling; keep >=2 parallel grid steps where possible (v7x megacore).
    tq = _tile(sq, q_tile, 8)
    while b * ((sq + tq - 1) // tq) < 2 and tq > 8:
        new_tq = max(8, ((tq // 2) // 8) * 8)
        if new_tq == tq:
            break
        tq = new_tq

    # Flash-style KV tiling: bounded VMEM independent of Sk.
    kv_target = _kv_tile_target()
    tk = sk if sk <= kv_target else (kv_target // 128) * 128
    n_kv = (sk + tk - 1) // tk
    sk_pad = n_kv * tk

    if mask is not None:
        mask = _normalize_mask(mask, sq, sk)

    if sk_pad != sk:                      # zero-pad KV; padded columns masked in-kernel
        pad = sk_pad - sk
        k = jnp.pad(k, ((0, 0), (0, pad), (0, 0)))
        v = jnp.pad(v, ((0, 0), (0, pad), (0, 0)))
        if mask is not None:
            mask = jnp.pad(mask, ((0, 0), (0, 0), (0, 0), (0, pad)))

    has_mask = mask is not None
    mask_heads = int(mask.shape[1]) if has_mask else 1
    scale = 1.0 / math.sqrt(key_size)

    kernel = functools.partial(
        _attn_kernel, num_heads=num_heads, key_size=key_size,
        value_size=value_size, scale=scale, has_mask=has_mask,
        mask_heads=mask_heads, kv_len=sk, kv_tile=tk)

    in_specs = [
        pl.BlockSpec((1, tq, dqt), lambda bi, qi, ki: (bi, qi, 0)),   # q: resident over KV axis
        pl.BlockSpec((1, tk, dqt), lambda bi, qi, ki: (bi, ki, 0)),   # k: streamed per KV step
        pl.BlockSpec((1, tk, dvt), lambda bi, qi, ki: (bi, ki, 0)),   # v: streamed per KV step
    ]
    args = [q, k, v]
    if has_mask:
        if mask.shape[0] > 1:
            mask_map = lambda bi, qi, ki: (bi, 0, qi, ki)
        else:
            mask_map = lambda bi, qi, ki: (0, 0, qi, ki)
        in_specs.append(pl.BlockSpec((1, mask_heads, tq, tk), mask_map))
        args.append(mask)

    # TODO(synk): consider pipeline_mode=pl.Buffered(3) on the K/V BlockSpecs for
    # v5e/v6e if profiling shows exposed KV DMA latency.
    return pl.pallas_call(
        kernel,
        out_shape=jax.ShapeDtypeStruct((b, num_heads, sq, value_size), q.dtype),
        grid=(b, (sq + tq - 1) // tq, n_kv),
        in_specs=in_specs,
        out_specs=pl.BlockSpec((1, num_heads, tq, value_size),
                               lambda bi, qi, ki: (bi, 0, qi, 0)),
        scratch_shapes=[
            pltpu.VMEM((num_heads, tq, 1), jnp.float32),            # running max m
            pltpu.VMEM((num_heads, tq, 1), jnp.float32),            # running denom l
            pltpu.VMEM((num_heads, tq, value_size), jnp.float32),   # running numerator acc
        ],
        compiler_params=pltpu.CompilerParams(
            dimension_semantics=("parallel", "parallel", "arbitrary"),
            vmem_limit_bytes=_vmem_limit_bytes()),
    )(*args)


# ----------------------------------------------------------------------------
# Module forward (matches MultiHeadAttention.forward)
# ----------------------------------------------------------------------------
def mha_forward(params, query, key, value, mask=None, *, num_heads, key_size,
                value_size=None, model_size=None):
    """General path (separate q/k/v inputs, separate projections)."""
    value_size = value_size or key_size
    model_size = model_size or num_heads * key_size
    b, sq, _ = query.shape
    sk = key.shape[1]
    dq = num_heads * key_size
    dv = num_heads * value_size

    qf = linear(query.reshape(b * sq, -1), params["wq"], params["bq"])
    kf = linear(key.reshape(b * sk, -1), params["wk"], params["bk"])
    vf = linear(value.reshape(b * sk, -1), params["wv"], params["bv"])

    attn = mha_attention(qf.reshape(b, sq, dq), kf.reshape(b, sk, dq),
                         vf.reshape(b, sk, dv), mask,
                         num_heads=num_heads, key_size=key_size,
                         value_size=value_size)
    # Reference quirk: torch `.reshape(B, S, -1)` on the (B, H, S, Dv) einsum output
    # with NO head transpose -> pure C-order flat reshape (free: contiguous layout).
    # TODO(synk): fusing final_proj into the attention kernel is blocked by this
    # head-major flat reshape (final-proj rows mix heads / q-positions).
    attn_flat = attn.reshape(b * sq, dv)
    out = linear(attn_flat, params["wo"], params["bo"])
    return out.reshape(b, sq, model_size)


def mha_self_forward(params, x, mask=None, *, num_heads, key_size,
                     value_size=None, model_size=None):
    """Self-attention fast path (query = key = value = x): fused QKV projection."""
    value_size = value_size or key_size
    model_size = model_size or num_heads * key_size
    dq = num_heads * key_size
    dv = num_heads * value_size

    w_qkv = params.get("w_qkv")
    use_fused = (w_qkv is not None and dq == dv and
                 w_qkv.size * w_qkv.dtype.itemsize <= _FUSED_QKV_WEIGHT_MAX_BYTES)
    if not use_fused:
        return mha_forward(params, x, x, x, mask, num_heads=num_heads,
                           key_size=key_size, value_size=value_size,
                           model_size=model_size)

    b, s, _ = x.shape
    x2 = x.reshape(b * s, -1)
    qf, kf, vf = qkv_projection(x2, w_qkv, params["b_qkv"], dq, dq, dv)
    attn = mha_attention(qf.reshape(b, s, dq), kf.reshape(b, s, dq),
                         vf.reshape(b, s, dv), mask,
                         num_heads=num_heads, key_size=key_size,
                         value_size=value_size)
    attn_flat = attn.reshape(b * s, dv)      # reference's no-transpose flat reshape
    out = linear(attn_flat, params["wo"], params["bo"])
    return out.reshape(b, s, model_size)


# ----------------------------------------------------------------------------
# Parameter init (torch nn.Linear default init; weights stored as (in, out)).
# Faithful to the torch module: value_proj/final_proj operate on H*value_size features.
# ----------------------------------------------------------------------------
def _init_linear(key, fan_in, fan_out):
    kw, kb = jax.random.split(key)
    bound = 1.0 / math.sqrt(fan_in)
    w = jax.random.uniform(kw, (fan_in, fan_out), jnp.float32, -bound, bound)
    b = jax.random.uniform(kb, (fan_out,), jnp.float32, -bound, bound)
    return w, b


def init_mha_params(key, num_heads, key_size, value_size=None, model_size=None):
    value_size = value_size or key_size
    model_size = model_size or num_heads * key_size
    dq = num_heads * key_size
    dv = num_heads * value_size
    kq, kk, kv, ko = jax.random.split(key, 4)
    wq, bq = _init_linear(kq, dq, dq)
    wk, bk = _init_linear(kk, dq, dq)
    wv, bv = _init_linear(kv, dv, dv)
    wo, bo = _init_linear(ko, dv, model_size)
    params = dict(wq=wq, bq=bq, wk=wk, bk=bk, wv=wv, bv=bv, wo=wo, bo=bo)
    if dq == dv:  # self-attention fast path: fused (D, 3D) QKV weight
        params["w_qkv"] = jnp.concatenate([wq, wk, wv], axis=1)
        params["b_qkv"] = jnp.concatenate([bq, bk, bv], axis=0)
    return params


# ----------------------------------------------------------------------------
# Pure-JAX reference (mirrors the torch module exactly, incl. the reshape quirk)
# ----------------------------------------------------------------------------
def _reference_forward(params, query, key, value, mask, *, num_heads, key_size,
                       value_size=None):
    value_size = value_size or key_size
    with jax.default_matmul_precision("float32"):
        def proj(x, w, b, hs):
            y = x @ w + b
            bsz, s, _ = x.shape
            return y.reshape(bsz, s, num_heads, hs).transpose(0, 2, 1, 3)
        qh = proj(query, params["wq"], params["bq"], key_size)
        kh = proj(key, params["wk"], params["bk"], key_size)
        vh = proj(value, params["wv"], params["bv"], value_size)
        s = jnp.einsum("bhsd,bhqd->bhqs", kh, qh) / math.sqrt(key_size)
        if mask is not None:
            s = s + mask
        w_ = jax.nn.softmax(s, axis=-1)
        o = jnp.einsum("bhqs,bhsd->bhqd", w_, vh)
        o = o.reshape(query.shape[0], query.shape[1], -1)   # same no-transpose quirk
        return o @ params["wo"] + params["bo"]


# ----------------------------------------------------------------------------
if __name__ == "__main__":
    num_heads = 4
    key_size = 8
    B, S = 2, 8
    D = num_heads * key_size  # 32

    root = jax.random.PRNGKey(0)
    k_params, k_x = jax.random.split(root)
    params = init_mha_params(k_params, num_heads, key_size)
    x = jax.random.normal(k_x, (B, S, D), jnp.float32)

    fwd = jax.jit(functools.partial(mha_self_forward,
                                    num_heads=num_heads, key_size=key_size))

    # 1) mask=None path (module default)
    out = fwd(params, x)
    jax.block_until_ready(out)
    assert out.shape == (B, S, D) and out.dtype == jnp.float32
    ref = _reference_forward(params, x, x, x, None,
                             num_heads=num_heads, key_size=key_size)
    assert bool(jnp.allclose(out, ref, rtol=1e-2, atol=1e-2))

    # 2) additive-mask path (causal), un-broadcast (1, 1, S, S)
    causal = jnp.where(jnp.tril(jnp.ones((S, S), jnp.bool_)), 0.0, -1e9)
    mask = causal.astype(jnp.float32)[None, None]
    out_masked = fwd(params, x, mask)
    jax.block_until_ready(out_masked)
    assert out_masked.shape == (B, S, D)
    ref_masked = _reference_forward(params, x, x, x, mask,
                                    num_heads=num_heads, key_size=key_size)
    assert bool(jnp.allclose(out_masked, ref_masked, rtol=1e-2, atol=1e-2))

    print("KERNEL_OK")
</pallas_src>

<mosaic_0001>
module attributes {stable_mosaic.version = 11 : i64} {
  func.func @_linear_kernel(%arg0: i32, %arg1: i32, %arg2: memref<16x32xf32, #tpu.memory_space<vmem>>, %arg3: memref<32x32xf32, #tpu.memory_space<vmem>>, %arg4: memref<1x32xf32, #tpu.memory_space<vmem>>, %arg5: memref<16x32xf32, #tpu.memory_space<vmem>>) attributes {dimension_semantics = [#tpu.dimension_semantics<parallel>, #tpu.dimension_semantics<parallel>], iteration_bounds = array<i64: 1, 1>, scalar_prefetch = 0 : i64, scratch_operands = 0 : i64, tpu.core_type = #tpu.core_type<tc>, window_params = [{transform_indices = @transform_0, window_bounds = array<i64: 16, 32>}, {transform_indices = @transform_1, window_bounds = array<i64: 32, 32>}, {transform_indices = @transform_2, window_bounds = array<i64: 1, 32>}, {transform_indices = @transform_3, window_bounds = array<i64: 16, 32>}]} {
    %c0 = arith.constant 0 : index
    %c0_0 = arith.constant 0 : index
    %0 = vector.load %arg2[%c0, %c0_0] : memref<16x32xf32, #tpu.memory_space<vmem>>, vector<16x32xf32>
    %c0_1 = arith.constant 0 : index
    %c0_2 = arith.constant 0 : index
    %1 = vector.load %arg3[%c0_1, %c0_2] : memref<32x32xf32, #tpu.memory_space<vmem>>, vector<32x32xf32>
    %cst = arith.constant dense<0.000000e+00> : vector<16x32xf32>
    %2 = tpu.matmul %0, %1, %cst {dimension_numbers = #tpu.dot_dimension_numbers<[1], [0], [0], [1], [0, 0, 1, 1], [], []>} : vector<16x32xf32>, vector<32x32xf32>, vector<16x32xf32> -> vector<16x32xf32>
    %c0_3 = arith.constant 0 : index
    %c0_4 = arith.constant 0 : index
    %3 = vector.load %arg4[%c0_3, %c0_4] : memref<1x32xf32, #tpu.memory_space<vmem>>, vector<1x32xf32>
    %4 = vector.broadcast %3 : vector<1x32xf32> to vector<16x32xf32>
    %5 = arith.addf %2, %4 : vector<16x32xf32>
    %c0_5 = arith.constant 0 : index
    %c0_6 = arith.constant 0 : index
    %6 = vector.load %arg5[%c0_5, %c0_6] : memref<16x32xf32, #tpu.memory_space<vmem>>, vector<16x32xf32>
    tpu.vector_store %arg5[%c0_5, %c0_6], %5 {strides = array<i32>} : memref<16x32xf32, #tpu.memory_space<vmem>>, vector<16x32xf32>,
    return
  }
  func.func @transform_0(%arg0: i32, %arg1: i32) -> (i32, i32) {
    %c0_i32 = arith.constant 0 : i32
    %c0_i32_0 = arith.constant 0 : i32
    return %arg1, %c0_i32 : i32, i32
  }
  func.func @transform_1(%arg0: i32, %arg1: i32) -> (i32, i32) {
    %c0_i32 = arith.constant 0 : i32
    %c0_i32_0 = arith.constant 0 : i32
    return %c0_i32, %arg0 : i32, i32
  }
  func.func @transform_2(%arg0: i32, %arg1: i32) -> (i32, i32) {
    %c0_i32 = arith.constant 0 : i32
    %c0_i32_0 = arith.constant 0 : i32
    return %c0_i32, %arg0 : i32, i32
  }
  func.func @transform_3(%arg0: i32, %arg1: i32) -> (i32, i32) {
    %c0_i32 = arith.constant 0 : i32
    return %arg1, %arg0 : i32, i32
  }
}

module attributes {stable_mosaic.version = 11 : i64} {
  func.func @_attn_kernel(%arg0: i32, %arg1: i32, %arg2: i32, %arg3: memref<1x8x32xf32, #tpu.memory_space<vmem>>, %arg4: memref<1x8x32xf32, #tpu.memory_space<vmem>>, %arg5: memref<1x8x32xf32, #tpu.memory_space<vmem>>, %arg6: memref<1x4x8x8xf32, #tpu.memory_space<vmem>>, %arg7: memref<4x8x1xf32, #tpu.memory_space<vmem>>, %arg8: memref<4x8x1xf32, #tpu.memory_space<vmem>>, %arg9: memref<4x8x8xf32, #tpu.memory_space<vmem>>) attributes {dimension_semantics = [#tpu.dimension_semantics<parallel>, #tpu.dimension_semantics<parallel>, #tpu.dimension_semantics<arbitrary>], iteration_bounds = array<i64: 2, 1, 1>, scalar_prefetch = 0 : i64, scratch_operands = 3 : i64, tpu.core_type = #tpu.core_type<tc>, window_params = [{transform_indices = @transform_0, window_bounds = array<i64: 1, 8, 32>}, {transform_indices = @transform_1, window_bounds = array<i64: 1, 8, 32>}, {transform_indices = @transform_2, window_bounds = array<i64: 1, 8, 32>}, {transform_indices = @transform_3, window_bounds = array<i64: 1, 4, 8, 8>}]} {
    %c0_i32 = arith.constant 0 : i32
    %0 = arith.cmpi eq, %arg2, %c0_i32 : i32
    %1 = arith.extui %0 : i1 to i32
    %c0_i32_0 = arith.constant 0 : i32
    %2 = arith.cmpi ne, %1, %c0_i32_0 : i32
    scf.if %2 {
      %cst_96 = arith.constant 0xFF800000 : f32
      %154 = vector.broadcast %cst_96 : f32 to vector<4x8x1xf32>
      %c0_97 = arith.constant 0 : index
      %c0_98 = arith.constant 0 : index
      %c0_99 = arith.constant 0 : index
      %155 = vector.load %arg7[%c0_97, %c0_98, %c0_99] : memref<4x8x1xf32, #tpu.memory_space<vmem>>, vector<4x8x1xf32>
      tpu.vector_store %arg7[%c0_97, %c0_98, %c0_99], %154 {strides = array<i32>} : memref<4x8x1xf32, #tpu.memory_space<vmem>>, vector<4x8x1xf32>,
      %cst_100 = arith.constant 0.000000e+00 : f32
      %156 = vector.broadcast %cst_100 : f32 to vector<4x8x1xf32>
      %c0_101 = arith.constant 0 : index
      %c0_102 = arith.constant 0 : index
      %c0_103 = arith.constant 0 : index
      %157 = vector.load %arg8[%c0_101, %c0_102, %c0_103] : memref<4x8x1xf32, #tpu.memory_space<vmem>>, vector<4x8x1xf32>
      tpu.vector_store %arg8[%c0_101, %c0_102, %c0_103], %156 {strides = array<i32>} : memref<4x8x1xf32, #tpu.memory_space<vmem>>, vector<4x8x1xf32>,
      %cst_104 = arith.constant 0.000000e+00 : f32
      %158 = vector.broadcast %cst_104 : f32 to vector<4x8x8xf32>
      %c0_105 = arith.constant 0 : index
      %c0_106 = arith.constant 0 : index
      %c0_107 = arith.constant 0 : index
      %159 = vector.load %arg9[%c0_105, %c0_106, %c0_107] : memref<4x8x8xf32, #tpu.memory_space<vmem>>, vector<4x8x8xf32>
      tpu.vector_store %arg9[%c0_105, %c0_106, %c0_107], %158 {strides = array<i32>} : memref<4x8x8xf32, #tpu.memory_space<vmem>>, vector<4x8x8xf32>,
    } else {
    }
    %c0 = arith.constant 0 : index
    %c0_1 = arith.constant 0 : index
    %c0_2 = arith.constant 0 : index
    %3 = vector.load %arg3[%c0, %c0_1, %c0_2] : memref<1x8x32xf32, #tpu.memory_space<vmem>>, vector<1x8x32xf32>
    %4 = vector.shape_cast %3 : vector<1x8x32xf32> to vector<8x32xf32>
    %cst = arith.constant 0.353553385 : f32
    %5 = vector.broadcast %cst : f32 to vector<8x32xf32>
    %6 = arith.mulf %4, %5 : vector<8x32xf32>
    %c0_3 = arith.constant 0 : index
    %c0_4 = arith.constant 0 : index
    %c0_5 = arith.constant 0 : index
    %7 = vector.load %arg4[%c0_3, %c0_4, %c0_5] : memref<1x8x32xf32, #tpu.memory_space<vmem>>, vector<1x8x32xf32>
    %8 = vector.shape_cast %7 : vector<1x8x32xf32> to vector<8x32xf32>
    %c0_6 = arith.constant 0 : index
    %c0_7 = arith.constant 0 : index
    %c0_8 = arith.constant 0 : index
    %9 = vector.load %arg5[%c0_6, %c0_7, %c0_8] : memref<1x8x32xf32, #tpu.memory_space<vmem>>, vector<1x8x32xf32>
    %10 = vector.shape_cast %9 : vector<1x8x32xf32> to vector<8x32xf32>
    %11 = vector.extract_strided_slice %6 {offsets = [0, 0], sizes = [8, 8], strides = [1, 1]} : vector<8x32xf32> to vector<8x8xf32>
    %12 = vector.extract_strided_slice %8 {offsets = [0, 0], sizes = [8, 8], strides = [1, 1]} : vector<8x32xf32> to vector<8x8xf32>
    %13 = vector.extract_strided_slice %10 {offsets = [0, 0], sizes = [8, 8], strides = [1, 1]} : vector<8x32xf32> to vector<8x8xf32>
    %cst_9 = arith.constant dense<0.000000e+00> : vector<8x8xf32>
    %14 = tpu.matmul %11, %12, %cst_9 {dimension_numbers = #tpu.dot_dimension_numbers<[1], [1], [0], [0], [0, 0, 1, 0], [], []>} : vector<8x8xf32>, vector<8x8xf32>, vector<8x8xf32> -> vector<8x8xf32>
    %c0_10 = arith.constant 0 : index
    %c0_11 = arith.constant 0 : index
    %c0_12 = arith.constant 0 : index
    %15 = vector.load %arg7[%c0_10, %c0_11, %c0_12] : memref<4x8x1xf32, #tpu.memory_space<vmem>>, vector<1x8x1xf32>
    %16 = vector.shape_cast %15 : vector<1x8x1xf32> to vector<8x1xf32>
    %cst_13 = arith.constant dense<0xFF800000> : vector<8xf32>
    %17 = vector.multi_reduction <maximumf>, %14, %cst_13 [1] : vector<8x8xf32> to vector<8xf32>
    %18 = vector.shape_cast %17 : vector<8xf32> to vector<8x1xf32>
    %19 = arith.maximumf %16, %18 : vector<8x1xf32>
    %20 = arith.subf %16, %19 : vector<8x1xf32>
    %21 = math.exp %20 : vector<8x1xf32>
    %22 = vector.broadcast %19 : vector<8x1xf32> to vector<8x8xf32>
    %23 = arith.subf %14, %22 : vector<8x8xf32>
    %24 = math.exp %23 : vector<8x8xf32>
    %c0_14 = arith.constant 0 : index
    %c0_15 = arith.constant 0 : index
    %c0_16 = arith.constant 0 : index
    %25 = vector.load %arg8[%c0_14, %c0_15, %c0_16] : memref<4x8x1xf32, #tpu.memory_space<vmem>>, vector<1x8x1xf32>
    %26 = vector.shape_cast %25 : vector<1x8x1xf32> to vector<8x1xf32>
    %27 = arith.mulf %21, %26 : vector<8x1xf32>
    %cst_17 = arith.constant dense<0.000000e+00> : vector<8xf32>
    %28 = vector.multi_reduction <add>, %24, %cst_17 [1] : vector<8x8xf32> to vector<8xf32>
    %29 = vector.shape_cast %28 : vector<8xf32> to vector<8x1xf32>
    %30 = arith.addf %27, %29 : vector<8x1xf32>
    %c0_18 = arith.constant 0 : index
    %c0_19 = arith.constant 0 : index
    %c0_20 = arith.constant 0 : index
    %31 = vector.load %arg8[%c0_18, %c0_19, %c0_20] : memref<4x8x1xf32, #tpu.memory_space<vmem>>, vector<1x8x1xf32>
    %32 = vector.shape_cast %31 : vector<1x8x1xf32> to vector<8x1xf32>
    %33 = vector.shape_cast %30 : vector<8x1xf32> to vector<1x8x1xf32>
    tpu.vector_store %arg8[%c0_18, %c0_19, %c0_20], %33 {strides = array<i32>} : memref<4x8x1xf32, #tpu.memory_space<vmem>>, vector<1x8x1xf32>,
    %c0_21 = arith.constant 0 : index
    %c0_22 = arith.constant 0 : index
    %c0_23 = arith.constant 0 : index
    %34 = vector.load %arg9[%c0_21, %c0_22, %c0_23] : memref<4x8x8xf32, #tpu.memory_space<vmem>>, vector<1x8x8xf32>
    %35 = vector.shape_cast %34 : vector<1x8x8xf32> to vector<8x8xf32>
    %36 = vector.broadcast %21 : vector<8x1xf32> to vector<8x8xf32>
    %37 = arith.mulf %36, %35 : vector<8x8xf32>
    %cst_24 = arith.constant dense<0.000000e+00> : vector<8x8xf32>
    %38 = tpu.matmul %24, %13, %cst_24 {dimension_numbers = #tpu.dot_dimension_numbers<[1], [0], [0], [1], [0, 0, 1, 1], [], []>} : vector<8x8xf32>, vector<8x8xf32>, vector<8x8xf32> -> vector<8x8xf32>
    %39 = arith.addf %37, %38 : vector<8x8xf32>
    %c0_25 = arith.constant 0 : index
    %c0_26 = arith.constant 0 : index
    %c0_27 = arith.constant 0 : index
    %40 = vector.load %arg9[%c0_25, %c0_26, %c0_27] : memref<4x8x8xf32, #tpu.memory_space<vmem>>, vector<1x8x8xf32>
    %41 = vector.shape_cast %40 : vector<1x8x8xf32> to vector<8x8xf32>
    %42 = vector.shape_cast %39 : vector<8x8xf32> to vector<1x8x8xf32>
    tpu.vector_store %arg9[%c0_25, %c0_26, %c0_27], %42 {strides = array<i32>} : memref<4x8x8xf32, #tpu.memory_space<vmem>>, vector<1x8x8xf32>,
    %c0_28 = arith.constant 0 : index
    %c0_29 = arith.constant 0 : index
    %c0_30 = arith.constant 0 : index
    %43 = vector.load %arg7[%c0_28, %c0_29, %c0_30] : memref<4x8x1xf32, #tpu.memory_space<vmem>>, vector<1x8x1xf32>
    %44 = vector.shape_cast %43 : vector<1x8x1xf32> to vector<8x1xf32>
    %45 = vector.shape_cast %19 : vector<8x1xf32> to vector<1x8x1xf32>
    tpu.vector_store %arg7[%c0_28, %c0_29, %c0_30], %45 {strides = array<i32>} : memref<4x8x1xf32, #tpu.memory_space<vmem>>, vector<1x8x1xf32>,
    %46 = vector.extract_strided_slice %6 {offsets = [0, 8], sizes = [8, 8], strides = [1, 1]} : vector<8x32xf32> to vector<8x8xf32>
    %47 = vector.extract_strided_slice %8 {offsets = [0, 8], sizes = [8, 8], strides = [1, 1]} : vector<8x32xf32> to vector<8x8xf32>
    %48 = vector.extract_strided_slice %10 {offsets = [0, 8], sizes = [8, 8], strides = [1, 1]} : vector<8x32xf32> to vector<8x8xf32>
    %cst_31 = arith.constant dense<0.000000e+00> : vector<8x8xf32>
    %49 = tpu.matmul %46, %47, %cst_31 {dimension_numbers = #tpu.dot_dimension_numbers<[1], [1], [0], [0], [0, 0, 1, 0], [], []>} : vector<8x8xf32>, vector<8x8xf32>, vector<8x8xf32> -> vector<8x8xf32>
    %c1 = arith.constant 1 : index
    %c0_32 = arith.constant 0 : index
    %c0_33 = arith.constant 0 : index
    %50 = vector.load %arg7[%c1, %c0_32, %c0_33] : memref<4x8x1xf32, #tpu.memory_space<vmem>>, vector<1x8x1xf32>
    %51 = vector.shape_cast %50 : vector<1x8x1xf32> to vector<8x1xf32>
    %cst_34 = arith.constant dense<0xFF800000> : vector<8xf32>
    %52 = vector.multi_reduction <maximumf>, %49, %cst_34 [1] : vector<8x8xf32> to vector<8xf32>
    %53 = vector.shape_cast %52 : vector<8xf32> to vector<8x1xf32>
    %54 = arith.maximumf %51, %53 : vector<8x1xf32>
    %55 = arith.subf %51, %54 : vector<8x1xf32>
    %56 = math.exp %55 : vector<8x1xf32>
    %57 = vector.broadcast %54 : vector<8x1xf32> to vector<8x8xf32>
    %58 = arith.subf %49, %57 : vector<8x8xf32>
    %59 = math.exp %58 : vector<8x8xf32>
    %c1_35 = arith.constant 1 : index
    %c0_36 = arith.constant 0 : index
    %c0_37 = arith.constant 0 : index
    %60 = vector.load %arg8[%c1_35, %c0_36, %c0_37] : memref<4x8x1xf32, #tpu.memory_space<vmem>>, vector<1x8x1xf32>
    %61 = vector.shape_cast %60 : vector<1x8x1xf32> to vector<8x1xf32>
    %62 = arith.mulf %56, %61 : vector<8x1xf32>
    %cst_38 = arith.constant dense<0.000000e+00> : vector<8xf32>
    %63 = vector.multi_reduction <add>, %59, %cst_38 [1] : vector<8x8xf32> to vector<8xf32>
    %64 = vector.shape_cast %63 : vector<8xf32> to vector<8x1xf32>
    %65 = arith.addf %62, %64 : vector<8x1xf32>
    %c1_39 = arith.constant 1 : index
    %c0_40 = arith.constant 0 : index
    %c0_41 = arith.constant 0 : index
    %66 = vector.load %arg8[%c1_39, %c0_40, %c0_41] : memref<4x8x1xf32, #tpu.memory_space<vmem>>, vector<1x8x1xf32>
    %67 = vector.shape_cast %66 : vector<1x8x1xf32> to vector<8x1xf32>
    %68 = vector.shape_cast %65 : vector<8x1xf32> to vector<1x8x1xf32>
    tpu.vector_store %arg8[%c1_39, %c0_40, %c0_41], %68 {strides = array<i32>} : memref<4x8x1xf32, #tpu.memory_space<vmem>>, vector<1x8x1xf32>,
    %c1_42 = arith.constant 1 : index
    %c0_43 = arith.constant 0 : index
    %c0_44 = arith.constant 0 : index
    %69 = vector.load %arg9[%c1_42, %c0_43, %c0_44] : memref<4x8x8xf32, #tpu.memory_space<vmem>>, vector<1x8x8xf32>
    %70 = vector.shape_cast %69 : vector<1x8x8xf32> to vector<8x8xf32>
    %71 = vector.broadcast %56 : vector<8x1xf32> to vector<8x8xf32>
    %72 = arith.mulf %71, %70 : vector<8x8xf32>
    %cst_45 = arith.constant dense<0.000000e+00> : vector<8x8xf32>
    %73 = tpu.matmul %59, %48, %cst_45 {dimension_numbers = #tpu.dot_dimension_numbers<[1], [0], [0], [1], [0, 0, 1, 1], [], []>} : vector<8x8xf32>, vector<8x8xf32>, vector<8x8xf32> -> vector<8x8xf32>
    %74 = arith.addf %72, %73 : vector<8x8xf32>
    %c1_46 = arith.constant 1 : index
    %c0_47 = arith.constant 0 : index
    %c0_48 = arith.constant 0 : index
    %75 = vector.load %arg9[%c1_46, %c0_47, %c0_48] : memref<4x8x8xf32, #tpu.memory_space<vmem>>, vector<1x8x8xf32>
    %76 = vector.shape_cast %75 : vector<1x8x8xf32> to vector<8x8xf32>
    %77 = vector.shape_cast %74 : vector<8x8xf32> to vector<1x8x8xf32>
    tpu.vector_store %arg9[%c1_46, %c0_47, %c0_48], %77 {strides = array<i32>} : memref<4x8x8xf32, #tpu.memory_space<vmem>>, vector<1x8x8xf32>,
    %c1_49 = arith.constant 1 : index
    %c0_50 = arith.constant 0 : index
    %c0_51 = arith.constant 0 : index
    %78 = vector.load %arg7[%c1_49, %c0_50, %c0_51] : memref<4x8x1xf32, #tpu.memory_space<vmem>>, vector<1x8x1xf32>
    %79 = vector.shape_cast %78 : vector<1x8x1xf32> to vector<8x1xf32>
    %80 = vector.shape_cast %54 : vector<8x1xf32> to vector<1x8x1xf32>
    tpu.vector_store %arg7[%c1_49, %c0_50, %c0_51], %80 {strides = array<i32>} : memref<4x8x1xf32, #tpu.memory_space<vmem>>, vector<1x8x1xf32>,
    %81 = vector.extract_strided_slice %6 {offsets = [0, 16], sizes = [8, 8], strides = [1, 1]} : vector<8x32xf32> to vector<8x8xf32>
    %82 = vector.extract_strided_slice %8 {offsets = [0, 16], sizes = [8, 8], strides = [1, 1]} : vector<8x32xf32> to vector<8x8xf32>
    %83 = vector.extract_strided_slice %10 {offsets = [0, 16], sizes = [8, 8], strides = [1, 1]} : vector<8x32xf32> to vector<8x8xf32>
    %cst_52 = arith.constant dense<0.000000e+00> : vector<8x8xf32>
    %84 = tpu.matmul %81, %82, %cst_52 {dimension_numbers = #tpu.dot_dimension_numbers<[1], [1], [0], [0], [0, 0, 1, 0], [], []>} : vector<8x8xf32>, vector<8x8xf32>, vector<8x8xf32> -> vector<8x8xf32>
    %c2 = arith.constant 2 : index
    %c0_53 = arith.constant 0 : index
    %c0_54 = arith.constant 0 : index
    %85 = vector.load %arg7[%c2, %c0_53, %c0_54] : memref<4x8x1xf32, #tpu.memory_space<vmem>>, vector<1x8x1xf32>
    %86 = vector.shape_cast %85 : vector<1x8x1xf32> to vector<8x1xf32>
    %cst_55 = arith.constant dense<0xFF800000> : vector<8xf32>
    %87 = vector.multi_reduction <maximumf>, %84, %cst_55 [1] : vector<8x8xf32> to vector<8xf32>
    %88 = vector.shape_cast %87 : vector<8xf32> to vector<8x1xf32>
    %89 = arith.maximumf %86, %88 : vector<8x1xf32>
    %90 = arith.subf %86, %89 : vector<8x1xf32>
    %91 = math.exp %90 : vector<8x1xf32>
    %92 = vector.broadcast %89 : vector<8x1xf32> to vector<8x8xf32>
    %93 = arith.subf %84, %92 : vector<8x8xf32>
    %94 = math.exp %93 : vector<8x8xf32>
    %c2_56 = arith.constant 2 : index
    %c0_57 = arith.constant 0 : index
    %c0_58 = arith.constant 0 : index
    %95 = vector.load %arg8[%c2_56, %c0_57, %c0_58] : memref<4x8x1xf32, #tpu.memory_space<vmem>>, vector<1x8x1xf32>
    %96 = vector.shape_cast %95 : vector<1x8x1xf32> to vector<8x1xf32>
    %97 = arith.mulf %91, %96 : vector<8x1xf32>
    %cst_59 = arith.constant dense<0.000000e+00> : vector<8xf32>
    %98 = vector.multi_reduction <add>, %94, %cst_59 [1] : vector<8x8xf32> to vector<8xf32>
    %99 = vector.shape_cast %98 : vector<8xf32> to vector<8x1xf32>
    %100 = arith.addf %97, %99 : vector<8x1xf32>
    %c2_60 = arith.constant 2 : index
    %c0_61 = arith.constant 0 : index
    %c0_62 = arith.constant 0 : index
    %101 = vector.load %arg8[%c2_60, %c0_61, %c0_62] : memref<4x8x1xf32, #tpu.memory_space<vmem>>, vector<1x8x1xf32>
    %102 = vector.shape_cast %101 : vector<1x8x1xf32> to vector<8x1xf32>
    %103 = vector.shape_cast %100 : vector<8x1xf32> to vector<1x8x1xf32>
    tpu.vector_store %arg8[%c2_60, %c0_61, %c0_62], %103 {strides = array<i32>} : memref<4x8x1xf32, #tpu.memory_space<vmem>>, vector<1x8x1xf32>,
    %c2_63 = arith.constant 2 : index
    %c0_64 = arith.constant 0 : index
    %c0_65 = arith.constant 0 : index
    %104 = vector.load %arg9[%c2_63, %c0_64, %c0_65] : memref<4x8x8xf32, #tpu.memory_space<vmem>>, vector<1x8x8xf32>
    %105 = vector.shape_cast %104 : vector<1x8x8xf32> to vector<8x8xf32>
    %106 = vector.broadcast %91 : vector<8x1xf32> to vector<8x8xf32>
    %107 = arith.mulf %106, %105 : vector<8x8xf32>
    %cst_66 = arith.constant dense<0.000000e+00> : vector<8x8xf32>
    %108 = tpu.matmul %94, %83, %cst_66 {dimension_numbers = #tpu.dot_dimension_numbers<[1], [0], [0], [1], [0, 0, 1, 1], [], []>} : vector<8x8xf32>, vector<8x8xf32>, vector<8x8xf32> -> vector<8x8xf32>
    %109 = arith.addf %107, %108 : vector<8x8xf32>
    %c2_67 = arith.constant 2 : index
    %c0_68 = arith.constant 0 : index
    %c0_69 = arith.constant 0 : index
    %110 = vector.load %arg9[%c2_67, %c0_68, %c0_69] : memref<4x8x8xf32, #tpu.memory_space<vmem>>, vector<1x8x8xf32>
    %111 = vector.shape_cast %110 : vector<1x8x8xf32> to vector<8x8xf32>
    %112 = vector.shape_cast %109 : vector<8x8xf32> to vector<1x8x8xf32>
    tpu.vector_store %arg9[%c2_67, %c0_68, %c0_69], %112 {strides = array<i32>} : memref<4x8x8xf32, #tpu.memory_space<vmem>>, vector<1x8x8xf32>,
    %c2_70 = arith.constant 2 : index
    %c0_71 = arith.constant 0 : index
    %c0_72 = arith.constant 0 : index
    %113 = vector.load %arg7[%c2_70, %c0_71, %c0_72] : memref<4x8x1xf32, #tpu.memory_space<vmem>>, vector<1x8x1xf32>
    %114 = vector.shape_cast %113 : vector<1x8x1xf32> to vector<8x1xf32>
    %115 = vector.shape_cast %89 : vector<8x1xf32> to vector<1x8x1xf32>
    tpu.vector_store %arg7[%c2_70, %c0_71, %c0_72], %115 {strides = array<i32>} : memref<4x8x1xf32, #tpu.memory_space<vmem>>, vector<1x8x1xf32>,
    %116 = vector.extract_strided_slice %6 {offsets = [0, 24], sizes = [8, 8], strides = [1, 1]} : vector<8x32xf32> to vector<8x8xf32>
    %117 = vector.extract_strided_slice %8 {offsets = [0, 24], sizes = [8, 8], strides = [1, 1]} : vector<8x32xf32> to vector<8x8xf32>
    %118 = vector.extract_strided_slice %10 {offsets = [0, 24], sizes = [8, 8], strides = [1, 1]} : vector<8x32xf32> to vector<8x8xf32>
    %cst_73 = arith.constant dense<0.000000e+00> : vector<8x8xf32>
    %119 = tpu.matmul %116, %117, %cst_73 {dimension_numbers = #tpu.dot_dimension_numbers<[1], [1], [0], [0], [0, 0, 1, 0], [], []>} : vector<8x8xf32>, vector<8x8xf32>, vector<8x8xf32> -> vector<8x8xf32>
    %c3 = arith.constant 3 : index
    %c0_74 = arith.constant 0 : index
    %c0_75 = arith.constant 0 : index
    %120 = vector.load %arg7[%c3, %c0_74, %c0_75] : memref<4x8x1xf32, #tpu.memory_space<vmem>>, vector<1x8x1xf32>
    %121 = vector.shape_cast %120 : vector<1x8x1xf32> to vector<8x1xf32>
    %cst_76 = arith.constant dense<0xFF800000> : vector<8xf32>
    %122 = vector.multi_reduction <maximumf>, %119, %cst_76 [1] : vector<8x8xf32> to vector<8xf32>
    %123 = vector.shape_cast %122 : vector<8xf32> to vector<8x1xf32>
    %124 = arith.maximumf %121, %123 : vector<8x1xf32>
    %125 = arith.subf %121, %124 : vector<8x1xf32>
    %126 = math.exp %125 : vector<8x1xf32>
    %127 = vector.broadcast %124 : vector<8x1xf32> to vector<8x8xf32>
    %128 = arith.subf %119, %127 : vector<8x8xf32>
    %129 = math.exp %128 : vector<8x8xf32>
    %c3_77 = arith.constant 3 : index
    %c0_78 = arith.constant 0 : index
    %c0_79 = arith.constant 0 : index
    %130 = vector.load %arg8[%c3_77, %c0_78, %c0_79] : memref<4x8x1xf32, #tpu.memory_space<vmem>>, vector<1x8x1xf32>
    %131 = vector.shape_cast %130 : vector<1x8x1xf32> to vector<8x1xf32>
    %132 = arith.mulf %126, %131 : vector<8x1xf32>
    %cst_80 = arith.constant dense<0.000000e+00> : vector<8xf32>
    %133 = vector.multi_reduction <add>, %129, %cst_80 [1] : vector<8x8xf32> to vector<8xf32>
    %134 = vector.shape_cast %133 : vector<8xf32> to vector<8x1xf32>
    %135 = arith.addf %132, %134 : vector<8x1xf32>
    %c3_81 = arith.constant 3 : index
    %c0_82 = arith.constant 0 : index
    %c0_83 = arith.constant 0 : index
    %136 = vector.load %arg8[%c3_81, %c0_82, %c0_83] : memref<4x8x1xf32, #tpu.memory_space<vmem>>, vector<1x8x1xf32>
    %137 = vector.shape_cast %136 : vector<1x8x1xf32> to vector<8x1xf32>
    %138 = vector.shape_cast %135 : vector<8x1xf32> to vector<1x8x1xf32>
    tpu.vector_store %arg8[%c3_81, %c0_82, %c0_83], %138 {strides = array<i32>} : memref<4x8x1xf32, #tpu.memory_space<vmem>>, vector<1x8x1xf32>,
    %c3_84 = arith.constant 3 : index
    %c0_85 = arith.constant 0 : index
    %c0_86 = arith.constant 0 : index
    %139 = vector.load %arg9[%c3_84, %c0_85, %c0_86] : memref<4x8x8xf32, #tpu.memory_space<vmem>>, vector<1x8x8xf32>
    %140 = vector.shape_cast %139 : vector<1x8x8xf32> to vector<8x8xf32>
    %141 = vector.broadcast %126 : vector<8x1xf32> to vector<8x8xf32>
    %142 = arith.mulf %141, %140 : vector<8x8xf32>
    %cst_87 = arith.constant dense<0.000000e+00> : vector<8x8xf32>
    %143 = tpu.matmul %129, %118, %cst_87 {dimension_numbers = #tpu.dot_dimension_numbers<[1], [0], [0], [1], [0, 0, 1, 1], [], []>} : vector<8x8xf32>, vector<8x8xf32>, vector<8x8xf32> -> vector<8x8xf32>
    %144 = arith.addf %142, %143 : vector<8x8xf32>
    %c3_88 = arith.constant 3 : index
    %c0_89 = arith.constant 0 : index
    %c0_90 = arith.constant 0 : index
    %145 = vector.load %arg9[%c3_88, %c0_89, %c0_90] : memref<4x8x8xf32, #tpu.memory_space<vmem>>, vector<1x8x8xf32>
    %146 = vector.shape_cast %145 : vector<1x8x8xf32> to vector<8x8xf32>
    %147 = vector.shape_cast %144 : vector<8x8xf32> to vector<1x8x8xf32>
    tpu.vector_store %arg9[%c3_88, %c0_89, %c0_90], %147 {strides = array<i32>} : memref<4x8x8xf32, #tpu.memory_space<vmem>>, vector<1x8x8xf32>,
    %c3_91 = arith.constant 3 : index
    %c0_92 = arith.constant 0 : index
    %c0_93 = arith.constant 0 : index
    %148 = vector.load %arg7[%c3_91, %c0_92, %c0_93] : memref<4x8x1xf32, #tpu.memory_space<vmem>>, vector<1x8x1xf32>
    %149 = vector.shape_cast %148 : vector<1x8x1xf32> to vector<8x1xf32>
    %150 = vector.shape_cast %124 : vector<8x1xf32> to vector<1x8x1xf32>
    tpu.vector_store %arg7[%c3_91, %c0_92, %c0_93], %150 {strides = array<i32>} : memref<4x8x1xf32, #tpu.memory_space<vmem>>, vector<1x8x1xf32>,
    %c0_i32_94 = arith.constant 0 : i32
    %151 = arith.cmpi eq, %arg2, %c0_i32_94 : i32
    %152 = arith.extui %151 : i1 to i32
    %c0_i32_95 = arith.constant 0 : i32
    %153 = arith.cmpi ne, %152, %c0_i32_95 : i32
    scf.if %153 {
      %c0_96 = arith.constant 0 : index
      %c0_97 = arith.constant 0 : index
      %c0_98 = arith.constant 0 : index
      %154 = vector.load %arg8[%c0_96, %c0_97, %c0_98] : memref<4x8x1xf32, #tpu.memory_space<vmem>>, vector<1x8x1xf32>
      %155 = vector.shape_cast %154 : vector<1x8x1xf32> to vector<8x1xf32>
      %156 = tpu.reciprocal %155 {approx = true} : vector<8x1xf32> -> vector<8x1xf32>
      %c0_99 = arith.constant 0 : index
      %c0_100 = arith.constant 0 : index
      %c0_101 = arith.constant 0 : index
      %157 = vector.load %arg9[%c0_99, %c0_100, %c0_101] : memref<4x8x8xf32, #tpu.memory_space<vmem>>, vector<1x8x8xf32>
      %158 = vector.shape_cast %157 : vector<1x8x8xf32> to vector<8x8xf32>
      %159 = vector.broadcast %156 : vector<8x1xf32> to vector<8x8xf32>
      %160 = arith.mulf %158, %159 : vector<8x8xf32>
      %c0_102 = arith.constant 0 : index
      %c0_103 = arith.constant 0 : index
      %c0_104 = arith.constant 0 : index
      %c0_105 = arith.constant 0 : index
      %161 = vector.load %arg6[%c0_102, %c0_103, %c0_104, %c0_105] : memref<1x4x8x8xf32, #tpu.memory_space<vmem>>, vector<1x1x8x8xf32>
      %162 = vector.shape_cast %161 : vector<1x1x8x8xf32> to vector<8x8xf32>
      %163 = vector.shape_cast %160 : vector<8x8xf32> to vector<1x1x8x8xf32>
      tpu.vector_store %arg6[%c0_102, %c0_103, %c0_104, %c0_105], %163 {strides = array<i32>} : memref<1x4x8x8xf32, #tpu.memory_space<vmem>>, vector<1x1x8x8xf32>,
      %c1_106 = arith.constant 1 : index
      %c0_107 = arith.constant 0 : index
      %c0_108 = arith.constant 0 : index
      %164 = vector.load %arg8[%c1_106, %c0_107, %c0_108] : memref<4x8x1xf32, #tpu.memory_space<vmem>>, vector<1x8x1xf32>
      %165 = vector.shape_cast %164 : vector<1x8x1xf32> to vector<8x1xf32>
      %166 = tpu.reciprocal %165 {approx = true} : vector<8x1xf32> -> vector<8x1xf32>
      %c1_109 = arith.constant 1 : index
      %c0_110 = arith.constant 0 : index
      %c0_111 = arith.constant 0 : index
      %167 = vector.load %arg9[%c1_109, %c0_110, %c0_111] : memref<4x8x8xf32, #tpu.memory_space<vmem>>, vector<1x8x8xf32>
      %168 = vector.shape_cast %167 : vector<1x8x8xf32> to vector<8x8xf32>
      %169 = vector.broadcast %166 : vector<8x1xf32> to vector<8x8xf32>
      %170 = arith.mulf %168, %169 : vector<8x8xf32>
      %c0_112 = arith.constant 0 : index
      %c1_113 = arith.constant 1 : index
      %c0_114 = arith.constant 0 : index
      %c0_115 = arith.constant 0 : index
      %171 = vector.load %arg6[%c0_112, %c1_113, %c0_114, %c0_115] : memref<1x4x8x8xf32, #tpu.memory_space<vmem>>, vector<1x1x8x8xf32>
      %172 = vector.shape_cast %171 : vector<1x1x8x8xf32> to vector<8x8xf32>
      %173 = vector.shape_cast %170 : vector<8x8xf32> to vector<1x1x8x8xf32>
      tpu.vector_store %arg6[%c0_112, %c1_113, %c0_114, %c0_115], %173 {strides = array<i32>} : memref<1x4x8x8xf32, #tpu.memory_space<vmem>>, vector<1x1x8x8xf32>,
      %c2_116 = arith.constant 2 : index
      %c0_117 = arith.constant 0 : index
      %c0_118 = arith.constant 0 : index
      %174 = vector.load %arg8[%c2_116, %c0_117, %c0_118] : memref<4x8x1xf32, #tpu.memory_space<vmem>>, vector<1x8x1xf32>
      %175 = vector.shape_cast %174 : vector<1x8x1xf32> to vector<8x1xf32>
      %176 = tpu.reciprocal %175 {approx = true} : vector<8x1xf32> -> vector<8x1xf32>
      %c2_119 = arith.constant 2 : index
      %c0_120 = arith.constant 0 : index
      %c0_121 = arith.constant 0 : index
      %177 = vector.load %arg9[%c2_119, %c0_120, %c0_121] : memref<4x8x8xf32, #tpu.memory_space<vmem>>, vector<1x8x8xf32>
      %178 = vector.shape_cast %177 : vector<1x8x8xf32> to vector<8x8xf32>
      %179 = vector.broadcast %176 : vector<8x1xf32> to vector<8x8xf32>
      %180 = arith.mulf %178, %179 : vector<8x8xf32>
      %c0_122 = arith.constant 0 : index
      %c2_123 = arith.constant 2 : index
      %c0_124 = arith.constant 0 : index
      %c0_125 = arith.constant 0 : index
      %181 = vector.load %arg6[%c0_122, %c2_123, %c0_124, %c0_125] : memref<1x4x8x8xf32, #tpu.memory_space<vmem>>, vector<1x1x8x8xf32>
      %182 = vector.shape_cast %181 : vector<1x1x8x8xf32> to vector<8x8xf32>
      %183 = vector.shape_cast %180 : vector<8x8xf32> to vector<1x1x8x8xf32>
      tpu.vector_store %arg6[%c0_122, %c2_123, %c0_124, %c0_125], %183 {strides = array<i32>} : memref<1x4x8x8xf32, #tpu.memory_space<vmem>>, vector<1x1x8x8xf32>,
      %c3_126 = arith.constant 3 : index
      %c0_127 = arith.constant 0 : index
      %c0_128 = arith.constant 0 : index
      %184 = vector.load %arg8[%c3_126, %c0_127, %c0_128] : memref<4x8x1xf32, #tpu.memory_space<vmem>>, vector<1x8x1xf32>
      %185 = vector.shape_cast %184 : vector<1x8x1xf32> to vector<8x1xf32>
      %186 = tpu.reciprocal %185 {approx = true} : vector<8x1xf32> -> vector<8x1xf32>
      %c3_129 = arith.constant 3 : index
      %c0_130 = arith.constant 0 : index
      %c0_131 = arith.constant 0 : index
      %187 = vector.load %arg9[%c3_129, %c0_130, %c0_131] : memref<4x8x8xf32, #tpu.memory_space<vmem>>, vector<1x8x8xf32>
      %188 = vector.shape_cast %187 : vector<1x8x8xf32> to vector<8x8xf32>
      %189 = vector.broadcast %186 : vector<8x1xf32> to vector<8x8xf32>
      %190 = arith.mulf %188, %189 : vector<8x8xf32>
      %c0_132 = arith.constant 0 : index
      %c3_133 = arith.constant 3 : index
      %c0_134 = arith.constant 0 : index
      %c0_135 = arith.constant 0 : index
      %191 = vector.load %arg6[%c0_132, %c3_133, %c0_134, %c0_135] : memref<1x4x8x8xf32, #tpu.memory_space<vmem>>, vector<1x1x8x8xf32>
      %192 = vector.shape_cast %191 : vector<1x1x8x8xf32> to vector<8x8xf32>
      %193 = vector.shape_cast %190 : vector<8x8xf32> to vector<1x1x8x8xf32>
      tpu.vector_store %arg6[%c0_132, %c3_133, %c0_134, %c0_135], %193 {strides = array<i32>} : memref<1x4x8x8xf32, #tpu.memory_space<vmem>>, vector<1x1x8x8xf32>,
    } else {
    }
    return
  }
  func.func @transform_0(%arg0: i32, %arg1: i32, %arg2: i32) -> (i32, i32, i32) {
    %c0_i32 = arith.constant 0 : i32
    %c0_i32_0 = arith.constant 0 : i32
    return %arg0, %arg1, %c0_i32 : i32, i32, i32
  }
  func.func @transform_1(%arg0: i32, %arg1: i32, %arg2: i32) -> (i32, i32, i32) {
    %c0_i32 = arith.constant 0 : i32
    %c0_i32_0 = arith.constant 0 : i32
    return %arg0, %arg2, %c0_i32 : i32, i32, i32
  }
  func.func @transform_2(%arg0: i32, %arg1: i32, %arg2: i32) -> (i32, i32, i32) {
    %c0_i32 = arith.constant 0 : i32
    %c0_i32_0 = arith.constant 0 : i32
    return %arg0, %arg2, %c0_i32 : i32, i32, i32
  }
  func.func @transform_3(%arg0: i32, %arg1: i32, %arg2: i32) -> (i32, i32, i32, i32) {
    %c0_i32 = arith.constant 0 : i32
    %c0_i32_0 = arith.constant 0 : i32
    %c0_i32_1 = arith.constant 0 : i32
    return %arg0, %c0_i32, %arg1, %c0_i32_0 : i32, i32, i32, i32
  }
}

module attributes {stable_mosaic.version = 11 : i64} {
  func.func @_qkv_proj_kernel(%arg0: i32, %arg1: memref<16x32xf32, #tpu.memory_space<vmem>>, %arg2: memref<32x96xf32, #tpu.memory_space<vmem>>, %arg3: memref<1x96xf32, #tpu.memory_space<vmem>>, %arg4: memref<16x32xf32, #tpu.memory_space<vmem>>, %arg5: memref<16x32xf32, #tpu.memory_space<vmem>>, %arg6: memref<16x32xf32, #tpu.memory_space<vmem>>) attributes {dimension_semantics = [#tpu.dimension_semantics<parallel>], iteration_bounds = array<i64: 1>, scalar_prefetch = 0 : i64, scratch_operands = 0 : i64, tpu.core_type = #tpu.core_type<tc>, window_params = [{transform_indices = @transform_0, window_bounds = array<i64: 16, 32>}, {pipeline_mode = #tpu.pipeline_mode<synchronous>, transform_indices = @transform_1, window_bounds = array<i64: 32, 96>}, {pipeline_mode = #tpu.pipeline_mode<synchronous>, transform_indices = @transform_2, window_bounds = array<i64: 1, 96>}, {transform_indices = @transform_3, window_bounds = array<i64: 16, 32>}, {transform_indices = @transform_4, window_bounds = array<i64: 16, 32>}, {transform_indices = @transform_5, window_bounds = array<i64: 16, 32>}]} {
    %c0 = arith.constant 0 : index
    %c0_0 = arith.constant 0 : index
    %0 = vector.load %arg1[%c0, %c0_0] : memref<16x32xf32, #tpu.memory_space<vmem>>, vector<16x32xf32>
    %c0_1 = arith.constant 0 : index
    %c0_2 = arith.constant 0 : index
    %1 = vector.load %arg2[%c0_1, %c0_2] : memref<32x96xf32, #tpu.memory_space<vmem>>, vector<32x96xf32>
    %cst = arith.constant dense<0.000000e+00> : vector<16x96xf32>
    %2 = tpu.matmul %0, %1, %cst {dimension_numbers = #tpu.dot_dimension_numbers<[1], [0], [0], [1], [0, 0, 1, 1], [], []>} : vector<16x32xf32>, vector<32x96xf32>, vector<16x96xf32> -> vector<16x96xf32>
    %c0_3 = arith.constant 0 : index
    %c0_4 = arith.constant 0 : index
    %3 = vector.load %arg3[%c0_3, %c0_4] : memref<1x96xf32, #tpu.memory_space<vmem>>, vector<1x96xf32>
    %4 = vector.broadcast %3 : vector<1x96xf32> to vector<16x96xf32>
    %5 = arith.addf %2, %4 : vector<16x96xf32>
    %6 = vector.extract_strided_slice %5 {offsets = [0, 0], sizes = [16, 32], strides = [1, 1]} : vector<16x96xf32> to vector<16x32xf32>
    %c0_5 = arith.constant 0 : index
    %c0_6 = arith.constant 0 : index
    %7 = vector.load %arg4[%c0_5, %c0_6] : memref<16x32xf32, #tpu.memory_space<vmem>>, vector<16x32xf32>
    tpu.vector_store %arg4[%c0_5, %c0_6], %6 {strides = array<i32>} : memref<16x32xf32, #tpu.memory_space<vmem>>, vector<16x32xf32>,
    %8 = vector.extract_strided_slice %5 {offsets = [0, 32], sizes = [16, 32], strides = [1, 1]} : vector<16x96xf32> to vector<16x32xf32>
    %c0_7 = arith.constant 0 : index
    %c0_8 = arith.constant 0 : index
    %9 = vector.load %arg5[%c0_7, %c0_8] : memref<16x32xf32, #tpu.memory_space<vmem>>, vector<16x32xf32>
    tpu.vector_store %arg5[%c0_7, %c0_8], %8 {strides = array<i32>} : memref<16x32xf32, #tpu.memory_space<vmem>>, vector<16x32xf32>,
    %10 = vector.extract_strided_slice %5 {offsets = [0, 64], sizes = [16, 32], strides = [1, 1]} : vector<16x96xf32> to vector<16x32xf32>
    %c0_9 = arith.constant 0 : index
    %c0_10 = arith.constant 0 : index
    %11 = vector.load %arg6[%c0_9, %c0_10] : memref<16x32xf32, #tpu.memory_space<vmem>>, vector<16x32xf32>
    tpu.vector_store %arg6[%c0_9, %c0_10], %10 {strides = array<i32>} : memref<16x32xf32, #tpu.memory_space<vmem>>, vector<16x32xf32>,
    return
  }
  func.func @transform_0(%arg0: i32) -> (i32, i32) {
    %c0_i32 = arith.constant 0 : i32
    %c0_i32_0 = arith.constant 0 : i32
    return %arg0, %c0_i32 : i32, i32
  }
  func.func @transform_1(%arg0: i32) -> (i32, i32) {
    %c0_i32 = arith.constant 0 : i32
    %c0_i32_0 = arith.constant 0 : i32
    %c0_i32_1 = arith.constant 0 : i32
    return %c0_i32, %c0_i32_0 : i32, i32
  }
  func.func @transform_2(%arg0: i32) -> (i32, i32) {
    %c0_i32 = arith.constant 0 : i32
    %c0_i32_0 = arith.constant 0 : i32
    %c0_i32_1 = arith.constant 0 : i32
    return %c0_i32, %c0_i32_0 : i32, i32
  }
  func.func @transform_3(%arg0: i32) -> (i32, i32) {
    %c0_i32 = arith.constant 0 : i32
    %c0_i32_0 = arith.constant 0 : i32
    return %arg0, %c0_i32 : i32, i32
  }
  func.func @transform_4(%arg0: i32) -> (i32, i32) {
    %c0_i32 = arith.constant 0 : i32
    %c0_i32_0 = arith.constant 0 : i32
    return %arg0, %c0_i32 : i32, i32
  }
  func.func @transform_5(%arg0: i32) -> (i32, i32) {
    %c0_i32 = arith.constant 0 : i32
    %c0_i32_0 = arith.constant 0 : i32
    return %arg0, %c0_i32 : i32, i32
  }
}

</mosaic_0001>

<llo_original>
// kernel: mha_self_forward.3
$region0: #{mha_self_forward.3}
  #allocation0 [shape = 'u32[]', space=smem, size = 0x4, offset = 0x4, fixed_abs, tag = 'smem constant byte address 0x4 - core index']
  #allocation1 [shape = 'u32[144,128]{1,0:T(1,128)}', space=vmem, size = 0x12000, scoped, tag = 'internal scratch']
  %s0 = inlined_call_operand.hbm [shape: f32[16,32], index: 0, kind: input, shape index: {}]
  %s1 = inlined_call_operand.hbm [shape: f32[32,96], index: 1, kind: input, shape index: {}]
  %s2 = inlined_call_operand.vmem [shape: f32[1,96], index: 2, kind: input, shape index: {}]
  %s3 = inlined_call_operand.vmem [shape: f32[16,32], index: 3, kind: output, shape index: {0}]
  %s4 = inlined_call_operand.vmem [shape: f32[16,32], index: 4, kind: output, shape index: {1}]
  %s5 = inlined_call_operand.vmem [shape: f32[16,32], index: 5, kind: output, shape index: {2}]
  %6 = xla_tuple %s3, %s4, %s5
  %s7 = sld [smem:[#allocation0]]
  $region46: #{mha_self_forward.3} parent=0
    _
  %s9 = ssub.s32 1, %s7
  %s10 = scalar_select 0, %s9, %s7
  $region1: #{mha_self_forward.3} parent=0
    #allocation2 [shape = 'u8[8192]{0}', space=vmem, size = 0x2000, scoped, tag = 'input window, operand 0, single buffered']
    #allocation3 [shape = 's32[1]{0}', space=sflag, size = 0x4, scoped, tag = 'scoped memory for mha_self_forward.3']
    #allocation4 [shape = 'u8[16384]{0}', space=vmem, size = 0x4000, scoped, tag = 'input window, operand 1, single buffered']
    #allocation5 [shape = 's32[1]{0}', space=sflag, size = 0x4, scoped, tag = 'scoped memory for mha_self_forward.3']
    %11 = vsyncpa [#allocation3], 0
    %12 = vsyncpa [#allocation5], 0
    // Predicated region
    $region2: #{mha_self_forward.3} parent=1 // pred_check
      _
    $region3: #{mha_self_forward.3} parent=1 // pred_check_branch
      %14 = sbr.rel (0) target = $region5
    $region4: #{mha_self_forward.3} parent=1 // pred_region
      %s16 = ssub.s32 256, 256
      %17 = vsyncadd [#allocation3], %s16
      %s18 = sshll.u32 [#allocation2], 4
      %s19 = int_to_ptr.vmem [resolvable:$true] %s18
      %24 = dma.hbm_to_vmem [thread:$0]  %s0, 256, %s19, [#allocation3], 128, 128, 8
    $region5: #{mha_self_forward.3} parent=1 // pred_fallthru
      _
    // Predicated region
    $region6: #{mha_self_forward.3} parent=1 // pred_check
      _
    $region7: #{mha_self_forward.3} parent=1 // pred_check_branch
      %26 = sbr.rel (0) target = $region9
    $region8: #{mha_self_forward.3} parent=1 // pred_region
      %s28 = ssub.s32 512, 512
      %29 = vsyncadd [#allocation5], %s28
      %s30 = sshll.u32 [#allocation4], 4
      %s31 = int_to_ptr.vmem [resolvable:$true] %s30
      %36 = dma.hbm_to_vmem [thread:$0]  %s1, 512, %s31, [#allocation5], 128, 128, 8
    $region9: #{mha_self_forward.3} parent=1 // pred_fallthru
      _
    // Predicated region
    $region10: #{mha_self_forward.3} parent=1 // pred_check
      _
    $region11: #{mha_self_forward.3} parent=1 // pred_check_branch
      %38 = sbr.rel (0) target = $region13
    $region12: #{mha_self_forward.3} parent=1 // pred_region
      _
    $region13: #{mha_self_forward.3} parent=1 // pred_fallthru
      _
    // Predicated region
    $region14: #{mha_self_forward.3} parent=1 // pred_check
      _
    $region15: #{mha_self_forward.3} parent=1 // pred_check_branch
      %40 = sbr.rel (0) target = $region17
    $region16: #{mha_self_forward.3} parent=1 // pred_region
      %41 = dma.done [#allocation3], 256
    $region17: #{mha_self_forward.3} parent=1 // pred_fallthru
      _
    // Predicated region
    $region18: #{mha_self_forward.3} parent=1 // pred_check
      _
    $region19: #{mha_self_forward.3} parent=1 // pred_check_branch
      %43 = sbr.rel (0) target = $region21
    $region20: #{mha_self_forward.3} parent=1 // pred_region
      %44 = dma.done [#allocation5], 512
    $region21: #{mha_self_forward.3} parent=1 // pred_fallthru
      _
    %v45 = vld [vmem:[#allocation2] sm:$0xff]
    %v46 = vld [vmem:[#allocation2 + $0x8] sm:$0xff]
    %v47 = vld [vmem:[#allocation4] sm:$0xff]
    %v48 = vld [vmem:[#allocation4 + $0x8] sm:$0xff]
    %v49 = vld [vmem:[#allocation4 + $0x10] sm:$0xff]
    %v50 = vld [vmem:[#allocation4 + $0x18] sm:$0xff]
    %v51 = vld [vmem:[%s2] sm:$0x1]
    %v53 = vlaneseq
    %v54 = vshrl.u32 %v53, 7
    %v55 = vsub.s32 0, %v54
    %v56 = vrot.slane %v51, %v55
    %vm58 = vcmask 261120
    %v60 = vsel %vm58, %v45, 0
    %v63 = vsel %vm58, %v46, 0
    %65 = vmatprep.subr.mxu0 0.0
    %66 = vmatpush1.msra.mxu0 0.0
    %67 = vmatprep.subr.mxu0 0.0
    %68 = vmatpush1.msra.mxu0 0.0
    %69 = vmatprep.subr.mxu0 0.0
    %70 = vmatpush1.msra.mxu0 0.0
    %71 = vmatprep.subr.mxu0 0.0
    %72 = vmatpush1.msra.mxu0 0.0
    %73 = vmatprep.subr.mxu0 0.0
    %74 = vmatpush1.msra.mxu0 0.0
    %75 = vmatprep.subr.mxu0 0.0
    %76 = vmatpush1.msra.mxu0 0.0
    %77 = vmatprep.subr.mxu0 0.0
    %78 = vmatpush1.msra.mxu0 0.0
    %79 = vmatprep.subr.mxu0 0.0
    %80 = vmatpush1.msra.mxu0 0.0
    %81 = vmatprep.subr.mxu0 0.0
    %82 = vmatpush1.msra.mxu0 0.0
    %83 = vmatprep.subr.mxu0 0.0
    %84 = vmatpush1.msra.mxu0 0.0
    %85 = vmatprep.subr.mxu0 0.0
    %86 = vmatpush1.msra.mxu0 0.0
    %87 = vmatprep.subr.mxu0 0.0
    %88 = vmatpush1.msra.mxu0 0.0
    %89 = vmatprep.subr.mxu0 0.0
    %90 = vmatpush1.msra.mxu0 %v50
    %91 = vmatprep.subr.mxu0 0.0
    %92 = vmatpush1.msra.mxu0 %v49
    %93 = vmatprep.subr.mxu0 0.0
    %94 = vmatpush1.msra.mxu0 %v48
    %95 = vmatprep.subr.mxu0 0.0
    %96 = vmatpush1.msra.mxu0 %v47
    %97 = vmatprep.subr.mxu0 0.0
    %98 = vmatpush2.msra.mxu0 0.0
    %99 = vmatprep.subr.mxu0 0.0
    %100 = vmatpush2.msra.mxu0 0.0
    %101 = vmatprep.subr.mxu0 0.0
    %102 = vmatpush2.msra.mxu0 0.0
    %103 = vmatprep.subr.mxu0 0.0
    %104 = vmatpush2.msra.mxu0 0.0
    %105 = vmatprep.subr.mxu0 0.0
    %106 = vmatpush2.msra.mxu0 0.0
    %107 = vmatprep.subr.mxu0 0.0
    %108 = vmatpush2.msra.mxu0 0.0
    %109 = vmatprep.subr.mxu0 0.0
    %110 = vmatpush2.msra.mxu0 0.0
    %111 = vmatprep.subr.mxu0 0.0
    %112 = vmatpush2.msra.mxu0 0.0
    %113 = vmatprep.subr.mxu0 0.0
    %114 = vmatpush2.msra.mxu0 0.0
    %115 = vmatprep.subr.mxu0 0.0
    %116 = vmatpush2.msra.mxu0 0.0
    %117 = vmatprep.subr.mxu0 0.0
    %118 = vmatpush2.msra.mxu0 0.0
    %119 = vmatprep.subr.mxu0 0.0
    %120 = vmatpush2.msra.mxu0 0.0
    %121 = vmatprep.subr.mxu0 0.0
    %122 = vmatpush2.msra.mxu0 0.0
    %123 = vmatprep.subr.mxu0 0.0
    %124 = vmatpush2.msra.mxu0 0.0
    %125 = vmatprep.subr.mxu0 0.0
    %126 = vmatpush2.msra.mxu0 0.0
    %127 = vmatprep.subr.mxu0 0.0
    %128 = vmatpush2.msra.mxu0 0.0
    %129 = vmatprep.mubr.f32.mxu0 0.0
    %130 = vmatmul.mubr.f32.gmra.mxu0 %v60
    %v131 = vpop.f32.mrf.mxu0
    %v132 = vadd.f32 %v56, %v131
    %v133 = vpop.f32.mrf.mxu0
    %134 = vmatprep.mubr.f32.mxu0 0.0
    %135 = vmatmul.mubr.f32.gmra.mxu0 %v63
    %v136 = vpop.f32.mrf.mxu0
    %v137 = vadd.f32 %v56, %v136
    %v138 = vpop.f32.mrf.mxu0
    %139 = vdwg.mxu0
    %140 = vst.msk [vmem:[%s3] sm:$0xff] %vm58, %v132
    %141 = vst.msk [vmem:[%s3 + $0x8] sm:$0xff] %vm58, %v137
    %144 = vrot.lane.b32.xlu0 %v132, 96
    %v145 = vpop.permute.xlu0 %144
    %146 = vrot.lane.b32.xlu0 %v137, 96
    %v147 = vpop.permute.xlu0 %146
    %150 = vst.msk [vmem:[%s4] sm:$0xff] %vm58, %v145
    %151 = vst.msk [vmem:[%s4 + $0x8] sm:$0xff] %vm58, %v147
    %152 = vrot.lane.b32.xlu0 %v132, 64
    %v153 = vpop.permute.xlu0 %152
    %154 = vrot.lane.b32.xlu0 %v137, 64
    %v155 = vpop.permute.xlu0 %154
    %158 = vst.msk [vmem:[%s5] sm:$0xff] %vm58, %v153
    %159 = vst.msk [vmem:[%s5 + $0x8] sm:$0xff] %vm58, %v155
    // Predicated region
    $region22: #{mha_self_forward.3} parent=1 // pred_check
      _
    $region23: #{mha_self_forward.3} parent=1 // pred_check_branch
      %161 = sbr.rel (0) target = $region25
    $region24: #{mha_self_forward.3} parent=1 // pred_region
      _
    $region25: #{mha_self_forward.3} parent=1 // pred_fallthru
      _
    // Predicated region
    $region26: #{mha_self_forward.3} parent=1 // pred_check
      _
    $region27: #{mha_self_forward.3} parent=1 // pred_check_branch
      %163 = sbr.rel (0) target = $region29
    $region28: #{mha_self_forward.3} parent=1 // pred_region
      _
    $region29: #{mha_self_forward.3} parent=1 // pred_fallthru
      _
    // Predicated region
    $region30: #{mha_self_forward.3} parent=1 // pred_check
      _
    $region31: #{mha_self_forward.3} parent=1 // pred_check_branch
      %165 = sbr.rel (0) target = $region33
    $region32: #{mha_self_forward.3} parent=1 // pred_region
      _
    $region33: #{mha_self_forward.3} parent=1 // pred_fallthru
      _
    // Predicated region
    $region34: #{mha_self_forward.3} parent=1 // pred_check
      _
    $region35: #{mha_self_forward.3} parent=1 // pred_check_branch
      %167 = sbr.rel (0) target = $region37
    $region36: #{mha_self_forward.3} parent=1 // pred_region
      _
    $region37: #{mha_self_forward.3} parent=1 // pred_fallthru
      _
    // Predicated region
    $region38: #{mha_self_forward.3} parent=1 // pred_check
      _
    $region39: #{mha_self_forward.3} parent=1 // pred_check_branch
      %169 = sbr.rel (0) target = $region41
    $region40: #{mha_self_forward.3} parent=1 // pred_region
      _
    $region41: #{mha_self_forward.3} parent=1 // pred_fallthru
      _
    // Predicated region
    $region42: #{mha_self_forward.3} parent=1 // pred_check
      _
    $region43: #{mha_self_forward.3} parent=1 // pred_check_branch
      %171 = sbr.rel (0) target = $region45
    $region44: #{mha_self_forward.3} parent=1 // pred_region
      _
    $region45: #{mha_self_forward.3} parent=1 // pred_fallthru
      _
    %172 = vsyncpa [#allocation3], 1
    %173 = vsyncpa [#allocation5], 1

// kernel: mha_self_forward.5
$region0: #{mha_self_forward.5}
  #allocation0 [shape = 'u32[]', space=smem, size = 0x4, offset = 0x4, fixed_abs, tag = 'smem constant byte address 0x4 - core index']
  #allocation1 [shape = 'u32[144,128]{1,0:T(1,128)}', space=vmem, size = 0x12000, scoped, tag = 'internal scratch']
  %s0 = inlined_call_operand.vmem [shape: f32[16,32], index: 0, kind: input, shape index: {}]
  %s1 = inlined_call_operand.vmem [shape: f32[32,32], index: 1, kind: input, shape index: {}]
  %s2 = inlined_call_operand.vmem [shape: f32[1,32], index: 2, kind: input, shape index: {}]
  %s3 = inlined_call_operand.hbm [shape: f32[16,32], index: 3, kind: output, shape index: {}]
  %s4 = sld [smem:[#allocation0]]
  $region22: #{mha_self_forward.5} parent=0
    _
  %s6 = ssub.s32 1, %s4
  %s7 = scalar_select 0, %s6, %s4
  $region1: #{mha_self_forward.5} parent=0
    #allocation2 [shape = 'u8[8192]{0}', space=vmem, size = 0x2000, scoped, tag = 'output window, operand 0, single buffered']
    #allocation3 [shape = 's32[1]{0}', space=sflag, size = 0x4, scoped, tag = 'scoped memory for mha_self_forward.5']
    %8 = vsyncpa [#allocation3], 0
    // Predicated region
    $region2: #{mha_self_forward.5} parent=1 // pred_check
      _
    $region3: #{mha_self_forward.5} parent=1 // pred_check_branch
      %10 = sbr.rel (0) target = $region5
    $region4: #{mha_self_forward.5} parent=1 // pred_region
      _
    $region5: #{mha_self_forward.5} parent=1 // pred_fallthru
      _
    // Predicated region
    $region6: #{mha_self_forward.5} parent=1 // pred_check
      _
    $region7: #{mha_self_forward.5} parent=1 // pred_check_branch
      %12 = sbr.rel (0) target = $region9
    $region8: #{mha_self_forward.5} parent=1 // pred_region
      _
    $region9: #{mha_self_forward.5} parent=1 // pred_fallthru
      _
    // Predicated region
    $region10: #{mha_self_forward.5} parent=1 // pred_check
      _
    $region11: #{mha_self_forward.5} parent=1 // pred_check_branch
      %14 = sbr.rel (0) target = $region13
    $region12: #{mha_self_forward.5} parent=1 // pred_region
      _
    $region13: #{mha_self_forward.5} parent=1 // pred_fallthru
      _
    %v15 = vld [vmem:[%s0] sm:$0xff]
    %v16 = vld [vmem:[%s0 + $0x8] sm:$0xff]
    %v17 = vld [vmem:[%s1] sm:$0xff]
    %v18 = vld [vmem:[%s1 + $0x8] sm:$0xff]
    %v19 = vld [vmem:[%s1 + $0x10] sm:$0xff]
    %v20 = vld [vmem:[%s1 + $0x18] sm:$0xff]
    %v21 = vld [vmem:[%s2] sm:$0x1]
    %v23 = vlaneseq
    %v24 = vshrl.u32 %v23, 7
    %v25 = vsub.s32 0, %v24
    %v26 = vrot.slane %v21, %v25
    %vm28 = vcmask 261120
    %v30 = vsel %vm28, %v15, 0
    %v33 = vsel %vm28, %v16, 0
    %35 = vmatprep.subr.mxu0 0.0
    %36 = vmatpush1.msra.mxu0 0.0
    %37 = vmatprep.subr.mxu0 0.0
    %38 = vmatpush1.msra.mxu0 0.0
    %39 = vmatprep.subr.mxu0 0.0
    %40 = vmatpush1.msra.mxu0 0.0
    %41 = vmatprep.subr.mxu0 0.0
    %42 = vmatpush1.msra.mxu0 0.0
    %43 = vmatprep.subr.mxu0 0.0
    %44 = vmatpush1.msra.mxu0 0.0
    %45 = vmatprep.subr.mxu0 0.0
    %46 = vmatpush1.msra.mxu0 0.0
    %47 = vmatprep.subr.mxu0 0.0
    %48 = vmatpush1.msra.mxu0 0.0
    %49 = vmatprep.subr.mxu0 0.0
    %50 = vmatpush1.msra.mxu0 0.0
    %51 = vmatprep.subr.mxu0 0.0
    %52 = vmatpush1.msra.mxu0 0.0
    %53 = vmatprep.subr.mxu0 0.0
    %54 = vmatpush1.msra.mxu0 0.0
    %55 = vmatprep.subr.mxu0 0.0
    %56 = vmatpush1.msra.mxu0 0.0
    %57 = vmatprep.subr.mxu0 0.0
    %58 = vmatpush1.msra.mxu0 0.0
    %59 = vmatprep.subr.mxu0 0.0
    %60 = vmatpush1.msra.mxu0 %v20
    %61 = vmatprep.subr.mxu0 0.0
    %62 = vmatpush1.msra.mxu0 %v19
    %63 = vmatprep.subr.mxu0 0.0
    %64 = vmatpush1.msra.mxu0 %v18
    %65 = vmatprep.subr.mxu0 0.0
    %66 = vmatpush1.msra.mxu0 %v17
    %67 = vmatprep.subr.mxu0 0.0
    %68 = vmatpush2.msra.mxu0 0.0
    %69 = vmatprep.subr.mxu0 0.0
    %70 = vmatpush2.msra.mxu0 0.0
    %71 = vmatprep.subr.mxu0 0.0
    %72 = vmatpush2.msra.mxu0 0.0
    %73 = vmatprep.subr.mxu0 0.0
    %74 = vmatpush2.msra.mxu0 0.0
    %75 = vmatprep.subr.mxu0 0.0
    %76 = vmatpush2.msra.mxu0 0.0
    %77 = vmatprep.subr.mxu0 0.0
    %78 = vmatpush2.msra.mxu0 0.0
    %79 = vmatprep.subr.mxu0 0.0
    %80 = vmatpush2.msra.mxu0 0.0
    %81 = vmatprep.subr.mxu0 0.0
    %82 = vmatpush2.msra.mxu0 0.0
    %83 = vmatprep.subr.mxu0 0.0
    %84 = vmatpush2.msra.mxu0 0.0
    %85 = vmatprep.subr.mxu0 0.0
    %86 = vmatpush2.msra.mxu0 0.0
    %87 = vmatprep.subr.mxu0 0.0
    %88 = vmatpush2.msra.mxu0 0.0
    %89 = vmatprep.subr.mxu0 0.0
    %90 = vmatpush2.msra.mxu0 0.0
    %91 = vmatprep.subr.mxu0 0.0
    %92 = vmatpush2.msra.mxu0 0.0
    %93 = vmatprep.subr.mxu0 0.0
    %94 = vmatpush2.msra.mxu0 0.0
    %95 = vmatprep.subr.mxu0 0.0
    %96 = vmatpush2.msra.mxu0 0.0
    %97 = vmatprep.subr.mxu0 0.0
    %98 = vmatpush2.msra.mxu0 0.0
    %99 = vmatprep.mubr.f32.mxu0 0.0
    %100 = vmatmul.mubr.f32.gmra.mxu0 %v30
    %v101 = vpop.f32.mrf.mxu0
    %v102 = vadd.f32 %v26, %v101
    %v103 = vpop.f32.mrf.mxu0
    %104 = vmatprep.mubr.f32.mxu0 0.0
    %105 = vmatmul.mubr.f32.gmra.mxu0 %v33
    %v106 = vpop.f32.mrf.mxu0
    %v107 = vadd.f32 %v26, %v106
    %v108 = vpop.f32.mrf.mxu0
    %109 = vdwg.mxu0
    %110 = vst.msk [vmem:[#allocation2] sm:$0xff] %vm28, %v102
    %111 = vst.msk [vmem:[#allocation2 + $0x8] sm:$0xff] %vm28, %v107
    // Predicated region
    $region14: #{mha_self_forward.5} parent=1 // pred_check
      _
    $region15: #{mha_self_forward.5} parent=1 // pred_check_branch
      %113 = sbr.rel (0) target = $region17
    $region16: #{mha_self_forward.5} parent=1 // pred_region
      %s115 = ssub.s32 256, 256
      %116 = vsyncadd [#allocation3], %s115
      %s117 = sshll.u32 [#allocation2], 4
      %s118 = int_to_ptr.vmem [resolvable:$true] %s117
      %123 = dma.vmem_to_hbm [thread:$0]  %s118, 256, %s3, [#allocation3], 128, 128, 8
    $region17: #{mha_self_forward.5} parent=1 // pred_fallthru
      _
    // Predicated region
    $region18: #{mha_self_forward.5} parent=1 // pred_check
      _
    $region19: #{mha_self_forward.5} parent=1 // pred_check_branch
      %125 = sbr.rel (0) target = $region21
    $region20: #{mha_self_forward.5} parent=1 // pred_region
      %126 = dma.done [#allocation3], 256
    $region21: #{mha_self_forward.5} parent=1 // pred_fallthru
      _
    %127 = vsyncpa [#allocation3], 1

// kernel: mha_self_forward.4
$region0: #{mha_self_forward.4}
  #allocation0 [shape = 'u32[]', space=smem, size = 0x4, offset = 0x4, fixed_abs, tag = 'smem constant byte address 0x4 - core index']
  #allocation1 [shape = 'u32[144,128]{1,0:T(1,128)}', space=vmem, size = 0x12000, scoped, tag = 'internal scratch']
  #allocation2 [shape = 'f32[4,8,1]{2,1,0:T(8,128)}', space=vmem, size = 0x4000, scoped, tag = 'scratch operand']
  #allocation3 [shape = 'f32[4,8,1]{2,1,0:T(8,128)}', space=vmem, size = 0x4000, scoped, tag = 'scratch operand']
  #allocation4 [shape = 'f32[4,8,8]{2,1,0:T(8,128)}', space=vmem, size = 0x4000, scoped, tag = 'scratch operand']
  %s0 = inlined_call_operand.vmem [shape: f32[2,8,32], index: 0, kind: input, shape index: {}]
  %s1 = inlined_call_operand.vmem [shape: f32[2,8,32], index: 1, kind: input, shape index: {}]
  %s2 = inlined_call_operand.vmem [shape: f32[2,8,32], index: 2, kind: input, shape index: {}]
  %s3 = inlined_call_operand.vmem [shape: f32[2,4,8,8], index: 3, kind: output, shape index: {}]
  %s4 = sld [smem:[#allocation0]]
  $region53: #{mha_self_forward.4} parent=0
    _
  %s6 = ssub.s32 1, %s4
  %s7 = scalar_select 0, %s6, %s4
  loop: start=0, step=1, limit=4
  $region2: #{mha_self_forward.4} parent=0 // loop_pre_header
    _
  $region3: #{mha_self_forward.4} parent=0 // loop_header
    %s9 = sphi 0, %s13
    %p10 = scmp.ge.s32.totalorder %s9, 4
    %s16 = sphi 0, %s35
    %s17 = sphi 0, %s31
    %s18 = sphi 0, %s27
    %s19 = sphi 0, %s16
    %s20 = sphi 0, %s17
    %s21 = sphi 0, %s18
    %s22 = sphi 0, %s19
    %s23 = sphi 0, %s20
    %s24 = sphi 0, %s21
    %s40 = sphi 0, %s42
    %s43 = sphi 0, %s40
    %s44 = sphi 0, %s43
    %s60 = sphi 0, %s44
    %s68 = sphi 0, %s70
    %s71 = sphi 0, %s68
    %s72 = sphi 0, %s71
    %s88 = sphi 0, %s72
    %s96 = sphi 0, %s98
    %s99 = sphi 0, %s96
    %s100 = sphi 0, %s99
    %s116 = sphi 0, %s100
    %s124 = sphi 0, %s126
    %s127 = sphi 0, %s124
    %s128 = sphi 0, %s127
    %s144 = sphi 0, %s128
  $region4: #{mha_self_forward.4} parent=0 // loop_header_branch
    %12 = sbr.rel (%p10) target = $region8
  $region5: #{mha_self_forward.4} parent=0 // loop_body
    %s14 = ssub.s32 %s9, 1
    %s15 = ssub.s32 %s9, 2
    %s25 = sadd.s32 1, %s18
    %p26 = scmp.ge.s32.totalorder %s25, 1
    %s27 = scalar_select %p26, 0, %s25
    %s28 = sadd.s32 1, %s17
    %s29 = scalar_select %p26, %s28, %s17
    %p30 = scmp.ge.s32.totalorder %s29, 1
    %s31 = scalar_select %p30, 0, %s29
    %s32 = sadd.s32 1, %s16
    %s33 = scalar_select %p30, %s32, %s16
    %p34 = scmp.ge.s32.totalorder %s33, 2
    %s35 = scalar_select %p34, 0, %s33
    %s36 = ssub.s32 %s16, %s35
    %s37 = ssub.s32 %s17, %s31
    %s38 = sor.u32 %s36, %s37
    %p39 = scmp.eq.s32.totalorder %s38, 0
    %s41 = sadd.s32 %s40, 1
    %s42 = scalar_select %p39, %s40, %s41
    %p45 = pneg %p39
    %p46 = scmp.eq.s32.totalorder %s9, 1
    %p47 = por %p45, %p46
    %p48 = scmp.ne.s32.totalorder %s40, %s43
    %p49 = scmp.eq.s32.totalorder %s9, 0
    %p50 = por %p48, %p49
    %p51 = scmp.ne.s32.totalorder %s40, %s43
    %p52 = scmp.eq.s32.totalorder %s14, 1
    %p53 = por %p51, %p52
    %p54 = scmp.ne.s32.totalorder %s43, %s44
    %p55 = scmp.eq.s32.totalorder %s14, 0
    %p56 = por %p54, %p55
    %p57 = scmp.ne.s32.totalorder %s43, %s44
    %p58 = scmp.eq.s32.totalorder %s15, 1
    %p59 = por %p57, %p58
    %p61 = scmp.ne.s32.totalorder %s44, %s60
    %p62 = scmp.eq.s32.totalorder %s15, 0
    %p63 = por %p61, %p62
    %s64 = ssub.s32 %s16, %s35
    %s65 = ssub.s32 %s18, %s27
    %s66 = sor.u32 %s64, %s65
    %p67 = scmp.eq.s32.totalorder %s66, 0
    %s69 = sadd.s32 %s68, 1
    %s70 = scalar_select %p67, %s68, %s69
    %p73 = pneg %p67
    %p74 = scmp.eq.s32.totalorder %s9, 1
    %p75 = por %p73, %p74
    %p76 = scmp.ne.s32.totalorder %s68, %s71
    %p77 = scmp.eq.s32.totalorder %s9, 0
    %p78 = por %p76, %p77
    %p79 = scmp.ne.s32.totalorder %s68, %s71
    %p80 = scmp.eq.s32.totalorder %s14, 1
    %p81 = por %p79, %p80
    %p82 = scmp.ne.s32.totalorder %s71, %s72
    %p83 = scmp.eq.s32.totalorder %s14, 0
    %p84 = por %p82, %p83
    %p85 = scmp.ne.s32.totalorder %s71, %s72
    %p86 = scmp.eq.s32.totalorder %s15, 1
    %p87 = por %p85, %p86
    %p89 = scmp.ne.s32.totalorder %s72, %s88
    %p90 = scmp.eq.s32.totalorder %s15, 0
    %p91 = por %p89, %p90
    %s92 = ssub.s32 %s16, %s35
    %s93 = ssub.s32 %s18, %s27
    %s94 = sor.u32 %s92, %s93
    %p95 = scmp.eq.s32.totalorder %s94, 0
    %s97 = sadd.s32 %s96, 1
    %s98 = scalar_select %p95, %s96, %s97
    %p101 = pneg %p95
    %p102 = scmp.eq.s32.totalorder %s9, 1
    %p103 = por %p101, %p102
    %p104 = scmp.ne.s32.totalorder %s96, %s99
    %p105 = scmp.eq.s32.totalorder %s9, 0
    %p106 = por %p104, %p105
    %p107 = scmp.ne.s32.totalorder %s96, %s99
    %p108 = scmp.eq.s32.totalorder %s14, 1
    %p109 = por %p107, %p108
    %p110 = scmp.ne.s32.totalorder %s99, %s100
    %p111 = scmp.eq.s32.totalorder %s14, 0
    %p112 = por %p110, %p111
    %p113 = scmp.ne.s32.totalorder %s99, %s100
    %p114 = scmp.eq.s32.totalorder %s15, 1
    %p115 = por %p113, %p114
    %p117 = scmp.ne.s32.totalorder %s100, %s116
    %p118 = scmp.eq.s32.totalorder %s15, 0
    %p119 = por %p117, %p118
    %s120 = ssub.s32 %s16, %s35
    %s121 = ssub.s32 %s17, %s31
    %s122 = sor.u32 %s120, %s121
    %p123 = scmp.eq.s32.totalorder %s122, 0
    %s125 = sadd.s32 %s124, 1
    %s126 = scalar_select %p123, %s124, %s125
    %p129 = pneg %p123
    %p130 = scmp.eq.s32.totalorder %s9, 1
    %p131 = por %p129, %p130
    %p132 = scmp.ne.s32.totalorder %s124, %s127
    %p133 = scmp.eq.s32.totalorder %s9, 0
    %p134 = por %p132, %p133
    %p135 = scmp.ne.s32.totalorder %s124, %s127
    %p136 = scmp.eq.s32.totalorder %s14, 1
    %p137 = por %p135, %p136
    %p138 = scmp.ne.s32.totalorder %s127, %s128
    %p139 = scmp.eq.s32.totalorder %s14, 0
    %p140 = por %p138, %p139
    %p141 = scmp.ne.s32.totalorder %s127, %s128
    %p142 = scmp.eq.s32.totalorder %s15, 1
    %p143 = por %p141, %p142
    %p145 = scmp.ne.s32.totalorder %s128, %s144
    %p146 = scmp.eq.s32.totalorder %s15, 0
    %p147 = por %p145, %p146
    %p148 = scmp.le.s32.totalorder 1, %s9
    %p149 = scmp.lt.s32.totalorder %s9, 3
    %p150 = pnand %p148, %p149
    %p151 = pneg %p150
    // Predicated region
    $region9: #{mha_self_forward.4} parent=5 // pred_check
      _
    $region10: #{mha_self_forward.4} parent=5 // pred_check_branch
      %153 = sbr.rel (%p150) target = $region12
    $region11: #{mha_self_forward.4} parent=5 // pred_region
      %s154 = ssub.s32 %s9, 1
    $region12: #{mha_self_forward.4} parent=5 // pred_fallthru
      _
    %p155 = scmp.lt.s32.totalorder %s9, 2
    // Predicated region
    $region13: #{mha_self_forward.4} parent=5 // pred_check
      %p156 = pneg %p155
    $region14: #{mha_self_forward.4} parent=5 // pred_check_branch
      %158 = sbr.rel (%p156) target = $region16
    $region15: #{mha_self_forward.4} parent=5 // pred_region
      // Predicated region
      $region17: #{mha_self_forward.4} parent=15 // pred_check
        %p159 = pneg %p50
      $region18: #{mha_self_forward.4} parent=15 // pred_check_branch
        %161 = sbr.rel (%p159) target = $region20
      $region19: #{mha_self_forward.4} parent=15 // pred_region
        %p162 = scmp.lt.s32.totalorder %s16, 1
        %s163 = scalar_select %p162, %s16, 1
        %p164 = scmp.lt.s32.totalorder %s17, 0
        %s165 = scalar_select %p164, %s17, 0
        %s166 = sadd.s32 %s165, %s163
        %s167 = smul.addr %s166, 8
        %s168 = scalar_lea.vmem %s0, %s167
      $region20: #{mha_self_forward.4} parent=15 // pred_fallthru
        _
      // Predicated region
      $region21: #{mha_self_forward.4} parent=15 // pred_check
        %p169 = pneg %p78
      $region22: #{mha_self_forward.4} parent=15 // pred_check_branch
        %171 = sbr.rel (%p169) target = $region24
      $region23: #{mha_self_forward.4} parent=15 // pred_region
        %p172 = scmp.lt.s32.totalorder %s16, 1
        %s173 = scalar_select %p172, %s16, 1
        %p174 = scmp.lt.s32.totalorder %s18, 0
        %s175 = scalar_select %p174, %s18, 0
        %s176 = sadd.s32 %s175, %s173
        %s177 = smul.addr %s176, 8
        %s178 = scalar_lea.vmem %s1, %s177
      $region24: #{mha_self_forward.4} parent=15 // pred_fallthru
        _
      // Predicated region
      $region25: #{mha_self_forward.4} parent=15 // pred_check
        %p179 = pneg %p106
      $region26: #{mha_self_forward.4} parent=15 // pred_check_branch
        %181 = sbr.rel (%p179) target = $region28
      $region27: #{mha_self_forward.4} parent=15 // pred_region
        %p182 = scmp.lt.s32.totalorder %s16, 1
        %s183 = scalar_select %p182, %s16, 1
        %p184 = scmp.lt.s32.totalorder %s18, 0
        %s185 = scalar_select %p184, %s18, 0
        %s186 = sadd.s32 %s185, %s183
        %s187 = smul.addr %s186, 8
        %s188 = scalar_lea.vmem %s2, %s187
      $region28: #{mha_self_forward.4} parent=15 // pred_fallthru
        _
    $region16: #{mha_self_forward.4} parent=5 // pred_fallthru
      _
    %p189 = scmp.le.s32.totalorder 1, %s9
    %p190 = scmp.lt.s32.totalorder %s9, 3
    %p191 = pnand %p189, %p190
    %p192 = pneg %p191
    // Predicated region
    $region29: #{mha_self_forward.4} parent=5 // pred_check
      _
    $region30: #{mha_self_forward.4} parent=5 // pred_check_branch
      %194 = sbr.rel (%p191) target = $region32
    $region31: #{mha_self_forward.4} parent=5 // pred_region
      %s195 = ssub.s32 %s9, 1
      %p196 = scmp.lt.s32.totalorder %s19, 1
      %s197 = scalar_select %p196, %s19, 1
      %p198 = scmp.lt.s32.totalorder %s20, 0
      %s199 = scalar_select %p198, %s20, 0
      %s200 = sadd.s32 %s199, %s197
      %s201 = smul.addr %s200, 8
      %s202 = scalar_lea.vmem %s0, %s201
      %p203 = pneg %p56
      %p204 = pneg %p53
      %p205 = scmp.lt.s32.totalorder %s19, 1
      %s206 = scalar_select %p205, %s19, 1
      %p207 = scmp.lt.s32.totalorder %s21, 0
      %s208 = scalar_select %p207, %s21, 0
      %s209 = sadd.s32 %s208, %s206
      %s210 = smul.addr %s209, 8
      %s211 = scalar_lea.vmem %s1, %s210
      %p212 = pneg %p84
      %p213 = pneg %p81
      %p214 = scmp.lt.s32.totalorder %s19, 1
      %s215 = scalar_select %p214, %s19, 1
      %p216 = scmp.lt.s32.totalorder %s21, 0
      %s217 = scalar_select %p216, %s21, 0
      %s218 = sadd.s32 %s217, %s215
      %s219 = smul.addr %s218, 8
      %s220 = scalar_lea.vmem %s2, %s219
      %p221 = pneg %p112
      %p222 = pneg %p109
      %p223 = pneg %p140
      %p224 = pneg %p137
      %p225 = scmp.lt.s32.totalorder %s19, 1
      %s226 = scalar_select %p225, %s19, 1
      %p227 = scmp.lt.s32.totalorder %s20, 0
      %s228 = scalar_select %p227, %s20, 0
      %s229 = smul.addr %s226, 4
      %s230 = sadd.s32 %s228, %s229
      %s231 = smul.addr %s230, 8
      %s232 = scalar_lea.vmem %s3, %s231
      %p233 = scmp.lt.s32.totalorder %s19, 1
      %s234 = scalar_select %p233, %s19, 1
      %p235 = scmp.lt.s32.totalorder %s20, 0
      %s236 = scalar_select %p235, %s20, 0
      %s237 = sadd.s32 %s236, %s234
      %s238 = smul.addr %s237, 8
      %s239 = scalar_lea.vmem %s0, %s238
      %p240 = scmp.lt.s32.totalorder %s19, 1
      %s241 = scalar_select %p240, %s19, 1
      %p242 = scmp.lt.s32.totalorder %s21, 0
      %s243 = scalar_select %p242, %s21, 0
      %s244 = sadd.s32 %s243, %s241
      %s245 = smul.addr %s244, 8
      %s246 = scalar_lea.vmem %s1, %s245
      %p247 = scmp.lt.s32.totalorder %s19, 1
      %s248 = scalar_select %p247, %s19, 1
      %p249 = scmp.lt.s32.totalorder %s21, 0
      %s250 = scalar_select %p249, %s21, 0
      %s251 = sadd.s32 %s250, %s248
      %s252 = smul.addr %s251, 8
      %s253 = scalar_lea.vmem %s2, %s252
      %p254 = scmp.lt.s32.totalorder %s19, 1
      %s255 = scalar_select %p254, %s19, 1
      %p256 = scmp.lt.s32.totalorder %s20, 0
      %s257 = scalar_select %p256, %s20, 0
      %s258 = smul.addr %s255, 4
      %s259 = sadd.s32 %s257, %s258
      %s260 = smul.addr %s259, 8
      %s261 = scalar_lea.vmem %s3, %s260
      %p262 = scmp.eq.s32.totalorder %s21, 0
      // Predicated region
      $region33: #{mha_self_forward.4} parent=31 // pred_check
        %p263 = pneg %p262
      $region34: #{mha_self_forward.4} parent=31 // pred_check_branch
        %265 = sbr.rel (%p263) target = $region36
      $region35: #{mha_self_forward.4} parent=31 // pred_region
        %vm266 = vcmask 7168
        %267 = vst.msk [vmem:[#allocation2] sm:$0xff] %vm266, -inf
        %268 = vst.msk [vmem:[#allocation2 + $0x8] sm:$0xff] %vm266, -inf
        %269 = vst.msk [vmem:[#allocation2 + $0x10] sm:$0xff] %vm266, -inf
        %270 = vst.msk [vmem:[#allocation2 + $0x18] sm:$0xff] %vm266, -inf
        %271 = vst.msk [vmem:[#allocation3] sm:$0xff] %vm266, 0.0
        %272 = vst.msk [vmem:[#allocation3 + $0x8] sm:$0xff] %vm266, 0.0
        %273 = vst.msk [vmem:[#allocation3 + $0x10] sm:$0xff] %vm266, 0.0
        %274 = vst.msk [vmem:[#allocation3 + $0x18] sm:$0xff] %vm266, 0.0
        %vm275 = vcmask 64512
        %276 = vst.msk [vmem:[#allocation4] sm:$0xff] %vm275, 0.0
        %277 = vst.msk [vmem:[#allocation4 + $0x8] sm:$0xff] %vm275, 0.0
        %278 = vst.msk [vmem:[#allocation4 + $0x10] sm:$0xff] %vm275, 0.0
        %279 = vst.msk [vmem:[#allocation4 + $0x18] sm:$0xff] %vm275, 0.0
      $region36: #{mha_self_forward.4} parent=31 // pred_fallthru
        _
      %v280 = vld [vmem:[%s239] sm:$0xff]
      %v281 = vmul.f32 %v280, 0.35355338
      %v282 = vld [vmem:[%s246] sm:$0xff]
      %v283 = vld [vmem:[%s253] sm:$0xff]
      %vm284 = vcmask 64512
      %v286 = vsel %vm284, %v281, 0
      %v289 = vsel %vm284, %v282, 0
      %291 = vmatprep.subr.mxu0 0.0
      %292 = vmatpush1.xpose.msra.mxu0 0.0
      %293 = vmatprep.subr.mxu0 0.0
      %294 = vmatpush1.xpose.msra.mxu0 0.0
      %295 = vmatprep.subr.mxu0 0.0
      %296 = vmatpush1.xpose.msra.mxu0 0.0
      %297 = vmatprep.subr.mxu0 0.0
      %298 = vmatpush1.xpose.msra.mxu0 0.0
      %299 = vmatprep.subr.mxu0 0.0
      %300 = vmatpush1.xpose.msra.mxu0 0.0
      %301 = vmatprep.subr.mxu0 0.0
      %302 = vmatpush1.xpose.msra.mxu0 0.0
      %303 = vmatprep.subr.mxu0 0.0
      %304 = vmatpush1.xpose.msra.mxu0 0.0
      %305 = vmatprep.subr.mxu0 0.0
      %306 = vmatpush1.xpose.msra.mxu0 0.0
      %307 = vmatprep.subr.mxu0 0.0
      %308 = vmatpush1.xpose.msra.mxu0 0.0
      %309 = vmatprep.subr.mxu0 0.0
      %310 = vmatpush1.xpose.msra.mxu0 0.0
      %311 = vmatprep.subr.mxu0 0.0
      %312 = vmatpush1.xpose.msra.mxu0 0.0
      %313 = vmatprep.subr.mxu0 0.0
      %314 = vmatpush1.xpose.msra.mxu0 0.0
      %315 = vmatprep.subr.mxu0 0.0
      %316 = vmatpush1.xpose.msra.mxu0 0.0
      %317 = vmatprep.subr.mxu0 0.0
      %318 = vmatpush1.xpose.msra.mxu0 0.0
      %319 = vmatprep.subr.mxu0 0.0
      %320 = vmatpush1.xpose.msra.mxu0 0.0
      %321 = vmatprep.subr.mxu0 0.0
      %322 = vmatpush1.xpose.msra.mxu0 %v289
      %323 = vmatprep.subr.mxu0 0.0
      %324 = vmatpush2.xpose.msra.mxu0 0.0
      %325 = vmatprep.subr.mxu0 0.0
      %326 = vmatpush2.xpose.msra.mxu0 0.0
      %327 = vmatprep.subr.mxu0 0.0
      %328 = vmatpush2.xpose.msra.mxu0 0.0
      %329 = vmatprep.subr.mxu0 0.0
      %330 = vmatpush2.xpose.msra.mxu0 0.0
      %331 = vmatprep.subr.mxu0 0.0
      %332 = vmatpush2.xpose.msra.mxu0 0.0
      %333 = vmatprep.subr.mxu0 0.0
      %334 = vmatpush2.xpose.msra.mxu0 0.0
      %335 = vmatprep.subr.mxu0 0.0
      %336 = vmatpush2.xpose.msra.mxu0 0.0
      %337 = vmatprep.subr.mxu0 0.0
      %338 = vmatpush2.xpose.msra.mxu0 0.0
      %339 = vmatprep.subr.mxu0 0.0
      %340 = vmatpush2.xpose.msra.mxu0 0.0
      %341 = vmatprep.subr.mxu0 0.0
      %342 = vmatpush2.xpose.msra.mxu0 0.0
      %343 = vmatprep.subr.mxu0 0.0
      %344 = vmatpush2.xpose.msra.mxu0 0.0
      %345 = vmatprep.subr.mxu0 0.0
      %346 = vmatpush2.xpose.msra.mxu0 0.0
      %347 = vmatprep.subr.mxu0 0.0
      %348 = vmatpush2.xpose.msra.mxu0 0.0
      %349 = vmatprep.subr.mxu0 0.0
      %350 = vmatpush2.xpose.msra.mxu0 0.0
      %351 = vmatprep.subr.mxu0 0.0
      %352 = vmatpush2.xpose.msra.mxu0 0.0
      %353 = vmatprep.subr.mxu0 0.0
      %354 = vmatpush2.xpose.msra.mxu0 0.0
      %355 = vmatprep.mubr.f32.mxu0 0.0
      %356 = vmatmul.mubr.f32.gmra.mxu0 %v286
      %v357 = vpop.f32.mrf.mxu0
      %v358 = vadd.f32 0.0, %v357
      %v359 = vpop.f32.mrf.mxu0
      %360 = vdwg.mxu0
      %v361 = vld [vmem:[#allocation2] sm:$0xff]
      %v362 = vsel %vm284, %v358, -inf
      %363 = vmax.xlane.f32.xlu0 %v362
      %v364 = vpop.xlane.xlu0 %363
      %v365 = vmax.f32 %v361, %v364
      %v366 = vsub.f32 %v361, %v365
      %v367 = vmul.f32 %v366, 1.442695
      %v368 = vpow.pop %v367
      %370 = vset.pattern.permute.xlu0 0
      %371 = vperm.xlu0 %370, %v365
      %v372 = vpop.permute.xlu0 %371
      %v374 = vsub.f32 %v358, %v372
      %v375 = vmul.f32 %v374, 1.442695
      %v376 = vpow.pop %v375
      %v377 = vld [vmem:[#allocation3] sm:$0xff]
      %v378 = vmul.f32 %v368, %v377
      %v379 = vsel %vm284, %v376, 0.0
      %380 = vadd.xlane.f32.xlu0 %v379
      %v381 = vpop.xlane.xlu0 %380
      %v382 = vadd.f32 %v378, %v381
      %vm383 = vcmask 7168
      %384 = vst.msk [vmem:[#allocation3] sm:$0xff] %vm383, %v382
      %v385 = vld [vmem:[#allocation4] sm:$0xff]
      %387 = vset.pattern.permute.xlu0 0
      %388 = vperm.xlu0 %387, %v368
      %v389 = vpop.permute.xlu0 %388
      %v391 = vmul.f32 %v389, %v385
      %v393 = vsel %vm284, %v376, 0
      %395 = vmatprep.subr.mxu0 0.0
      %396 = vmatpush1.msra.mxu0 0.0
      %397 = vmatprep.subr.mxu0 0.0
      %398 = vmatpush1.msra.mxu0 0.0
      %399 = vmatprep.subr.mxu0 0.0
      %400 = vmatpush1.msra.mxu0 0.0
      %401 = vmatprep.subr.mxu0 0.0
      %402 = vmatpush1.msra.mxu0 0.0
      %403 = vmatprep.subr.mxu0 0.0
      %404 = vmatpush1.msra.mxu0 0.0
      %405 = vmatprep.subr.mxu0 0.0
      %406 = vmatpush1.msra.mxu0 0.0
      %407 = vmatprep.subr.mxu0 0.0
      %408 = vmatpush1.msra.mxu0 0.0
      %409 = vmatprep.subr.mxu0 0.0
      %410 = vmatpush1.msra.mxu0 0.0
      %411 = vmatprep.subr.mxu0 0.0
      %412 = vmatpush1.msra.mxu0 0.0
      %413 = vmatprep.subr.mxu0 0.0
      %414 = vmatpush1.msra.mxu0 0.0
      %415 = vmatprep.subr.mxu0 0.0
      %416 = vmatpush1.msra.mxu0 0.0
      %417 = vmatprep.subr.mxu0 0.0
      %418 = vmatpush1.msra.mxu0 0.0
      %419 = vmatprep.subr.mxu0 0.0
      %420 = vmatpush1.msra.mxu0 0.0
      %421 = vmatprep.subr.mxu0 0.0
      %422 = vmatpush1.msra.mxu0 0.0
      %423 = vmatprep.subr.mxu0 0.0
      %424 = vmatpush1.msra.mxu0 0.0
      %425 = vmatprep.subr.mxu0 0.0
      %426 = vmatpush1.msra.mxu0 %v283
      %427 = vmatprep.subr.mxu0 0.0
      %428 = vmatpush2.msra.mxu0 0.0
      %429 = vmatprep.subr.mxu0 0.0
      %430 = vmatpush2.msra.mxu0 0.0
      %431 = vmatprep.subr.mxu0 0.0
      %432 = vmatpush2.msra.mxu0 0.0
      %433 = vmatprep.subr.mxu0 0.0
      %434 = vmatpush2.msra.mxu0 0.0
      %435 = vmatprep.subr.mxu0 0.0
      %436 = vmatpush2.msra.mxu0 0.0
      %437 = vmatprep.subr.mxu0 0.0
      %438 = vmatpush2.msra.mxu0 0.0
      %439 = vmatprep.subr.mxu0 0.0
      %440 = vmatpush2.msra.mxu0 0.0
      %441 = vmatprep.subr.mxu0 0.0
      %442 = vmatpush2.msra.mxu0 0.0
      %443 = vmatprep.subr.mxu0 0.0
      %444 = vmatpush2.msra.mxu0 0.0
      %445 = vmatprep.subr.mxu0 0.0
      %446 = vmatpush2.msra.mxu0 0.0
      %447 = vmatprep.subr.mxu0 0.0
      %448 = vmatpush2.msra.mxu0 0.0
      %449 = vmatprep.subr.mxu0 0.0
      %450 = vmatpush2.msra.mxu0 0.0
      %451 = vmatprep.subr.mxu0 0.0
      %452 = vmatpush2.msra.mxu0 0.0
      %453 = vmatprep.subr.mxu0 0.0
      %454 = vmatpush2.msra.mxu0 0.0
      %455 = vmatprep.subr.mxu0 0.0
      %456 = vmatpush2.msra.mxu0 0.0
      %457 = vmatprep.subr.mxu0 0.0
      %458 = vmatpush2.msra.mxu0 0.0
      %459 = vmatprep.mubr.f32.mxu0 0.0
      %460 = vmatmul.mubr.f32.gmra.mxu0 %v393
      %v461 = vpop.f32.mrf.mxu0
      %v462 = vadd.f32 0.0, %v461
      %v463 = vpop.f32.mrf.mxu0
      %464 = vdwg.mxu0
      %v465 = vadd.f32 %v391, %v462
      %466 = vst.msk [vmem:[#allocation4] sm:$0xff] %vm284, %v465
      %467 = vst.msk [vmem:[#allocation2] sm:$0xff] %vm383, %v365
      %468 = vrot.lane.b32.xlu0 %v281, 120
      %v469 = vpop.permute.xlu0 %468
      %470 = vrot.lane.b32.xlu0 %v282, 120
      %v471 = vpop.permute.xlu0 %470
      %v472 = vsel %vm284, %v469, 0
      %v474 = vsel %vm284, %v471, 0
      %476 = vmatprep.subr.mxu0 0.0
      %477 = vmatpush1.xpose.msra.mxu0 0.0
      %478 = vmatprep.subr.mxu0 0.0
      %479 = vmatpush1.xpose.msra.mxu0 0.0
      %480 = vmatprep.subr.mxu0 0.0
      %481 = vmatpush1.xpose.msra.mxu0 0.0
      %482 = vmatprep.subr.mxu0 0.0
      %483 = vmatpush1.xpose.msra.mxu0 0.0
      %484 = vmatprep.subr.mxu0 0.0
      %485 = vmatpush1.xpose.msra.mxu0 0.0
      %486 = vmatprep.subr.mxu0 0.0
      %487 = vmatpush1.xpose.msra.mxu0 0.0
      %488 = vmatprep.subr.mxu0 0.0
      %489 = vmatpush1.xpose.msra.mxu0 0.0
      %490 = vmatprep.subr.mxu0 0.0
      %491 = vmatpush1.xpose.msra.mxu0 0.0
      %492 = vmatprep.subr.mxu0 0.0
      %493 = vmatpush1.xpose.msra.mxu0 0.0
      %494 = vmatprep.subr.mxu0 0.0
      %495 = vmatpush1.xpose.msra.mxu0 0.0
      %496 = vmatprep.subr.mxu0 0.0
      %497 = vmatpush1.xpose.msra.mxu0 0.0
      %498 = vmatprep.subr.mxu0 0.0
      %499 = vmatpush1.xpose.msra.mxu0 0.0
      %500 = vmatprep.subr.mxu0 0.0
      %501 = vmatpush1.xpose.msra.mxu0 0.0
      %502 = vmatprep.subr.mxu0 0.0
      %503 = vmatpush1.xpose.msra.mxu0 0.0
      %504 = vmatprep.subr.mxu0 0.0
      %505 = vmatpush1.xpose.msra.mxu0 0.0
      %506 = vmatprep.subr.mxu0 0.0
      %507 = vmatpush1.xpose.msra.mxu0 %v474
      %508 = vmatprep.subr.mxu0 0.0
      %509 = vmatpush2.xpose.msra.mxu0 0.0
      %510 = vmatprep.subr.mxu0 0.0
      %511 = vmatpush2.xpose.msra.mxu0 0.0
      %512 = vmatprep.subr.mxu0 0.0
      %513 = vmatpush2.xpose.msra.mxu0 0.0
      %514 = vmatprep.subr.mxu0 0.0
      %515 = vmatpush2.xpose.msra.mxu0 0.0
      %516 = vmatprep.subr.mxu0 0.0
      %517 = vmatpush2.xpose.msra.mxu0 0.0
      %518 = vmatprep.subr.mxu0 0.0
      %519 = vmatpush2.xpose.msra.mxu0 0.0
      %520 = vmatprep.subr.mxu0 0.0
      %521 = vmatpush2.xpose.msra.mxu0 0.0
      %522 = vmatprep.subr.mxu0 0.0
      %523 = vmatpush2.xpose.msra.mxu0 0.0
      %524 = vmatprep.subr.mxu0 0.0
      %525 = vmatpush2.xpose.msra.mxu0 0.0
      %526 = vmatprep.subr.mxu0 0.0
      %527 = vmatpush2.xpose.msra.mxu0 0.0
      %528 = vmatprep.subr.mxu0 0.0
      %529 = vmatpush2.xpose.msra.mxu0 0.0
      %530 = vmatprep.subr.mxu0 0.0
      %531 = vmatpush2.xpose.msra.mxu0 0.0
      %532 = vmatprep.subr.mxu0 0.0
      %533 = vmatpush2.xpose.msra.mxu0 0.0
      %534 = vmatprep.subr.mxu0 0.0
      %535 = vmatpush2.xpose.msra.mxu0 0.0
      %536 = vmatprep.subr.mxu0 0.0
      %537 = vmatpush2.xpose.msra.mxu0 0.0
      %538 = vmatprep.subr.mxu0 0.0
      %539 = vmatpush2.xpose.msra.mxu0 0.0
      %540 = vmatprep.mubr.f32.mxu0 0.0
      %541 = vmatmul.mubr.f32.gmra.mxu0 %v472
      %v542 = vpop.f32.mrf.mxu0
      %v543 = vadd.f32 0.0, %v542
      %v544 = vpop.f32.mrf.mxu0
      %545 = vdwg.mxu0
      %s546 = scalar_lea.vmem [#allocation2], 8
      %v547 = vld [vmem:[%s546] sm:$0xff]
      %v548 = vsel %vm284, %v543, -inf
      %549 = vmax.xlane.f32.xlu0 %v548
      %v550 = vpop.xlane.xlu0 %549
      %v551 = vmax.f32 %v547, %v550
      %v552 = vsub.f32 %v547, %v551
      %v553 = vmul.f32 %v552, 1.442695
      %v554 = vpow.pop %v553
      %556 = vset.pattern.permute.xlu0 0
      %557 = vperm.xlu0 %556, %v551
      %v558 = vpop.permute.xlu0 %557
      %v560 = vsub.f32 %v543, %v558
      %v561 = vmul.f32 %v560, 1.442695
      %v562 = vpow.pop %v561
      %s563 = scalar_lea.vmem [#allocation3], 8
      %v564 = vld [vmem:[%s563] sm:$0xff]
      %v565 = vmul.f32 %v554, %v564
      %v566 = vsel %vm284, %v562, 0.0
      %567 = vadd.xlane.f32.xlu0 %v566
      %v568 = vpop.xlane.xlu0 %567
      %v569 = vadd.f32 %v565, %v568
      %570 = vst.msk [vmem:[%s563] sm:$0xff] %vm383, %v569
      %s571 = scalar_lea.vmem [#allocation4], 8
      %v572 = vld [vmem:[%s571] sm:$0xff]
      %574 = vset.pattern.permute.xlu0 0
      %575 = vperm.xlu0 %574, %v554
      %v576 = vpop.permute.xlu0 %575
      %v578 = vmul.f32 %v576, %v572
      %580 = vrot.lane.b32.xlu0 %v283, 120
      %v581 = vpop.permute.xlu0 %580
      %v584 = vsel %vm284, %v562, 0
      %586 = vmatprep.subr.mxu0 0.0
      %587 = vmatpush1.msra.mxu0 0.0
      %588 = vmatprep.subr.mxu0 0.0
      %589 = vmatpush1.msra.mxu0 0.0
      %590 = vmatprep.subr.mxu0 0.0
      %591 = vmatpush1.msra.mxu0 0.0
      %592 = vmatprep.subr.mxu0 0.0
      %593 = vmatpush1.msra.mxu0 0.0
      %594 = vmatprep.subr.mxu0 0.0
      %595 = vmatpush1.msra.mxu0 0.0
      %596 = vmatprep.subr.mxu0 0.0
      %597 = vmatpush1.msra.mxu0 0.0
      %598 = vmatprep.subr.mxu0 0.0
      %599 = vmatpush1.msra.mxu0 0.0
      %600 = vmatprep.subr.mxu0 0.0
      %601 = vmatpush1.msra.mxu0 0.0
      %602 = vmatprep.subr.mxu0 0.0
      %603 = vmatpush1.msra.mxu0 0.0
      %604 = vmatprep.subr.mxu0 0.0
      %605 = vmatpush1.msra.mxu0 0.0
      %606 = vmatprep.subr.mxu0 0.0
      %607 = vmatpush1.msra.mxu0 0.0
      %608 = vmatprep.subr.mxu0 0.0
      %609 = vmatpush1.msra.mxu0 0.0
      %610 = vmatprep.subr.mxu0 0.0
      %611 = vmatpush1.msra.mxu0 0.0
      %612 = vmatprep.subr.mxu0 0.0
      %613 = vmatpush1.msra.mxu0 0.0
      %614 = vmatprep.subr.mxu0 0.0
      %615 = vmatpush1.msra.mxu0 0.0
      %616 = vmatprep.subr.mxu0 0.0
      %617 = vmatpush1.msra.mxu0 %v581
      %618 = vmatprep.subr.mxu0 0.0
      %619 = vmatpush2.msra.mxu0 0.0
      %620 = vmatprep.subr.mxu0 0.0
      %621 = vmatpush2.msra.mxu0 0.0
      %622 = vmatprep.subr.mxu0 0.0
      %623 = vmatpush2.msra.mxu0 0.0
      %624 = vmatprep.subr.mxu0 0.0
      %625 = vmatpush2.msra.mxu0 0.0
      %626 = vmatprep.subr.mxu0 0.0
      %627 = vmatpush2.msra.mxu0 0.0
      %628 = vmatprep.subr.mxu0 0.0
      %629 = vmatpush2.msra.mxu0 0.0
      %630 = vmatprep.subr.mxu0 0.0
      %631 = vmatpush2.msra.mxu0 0.0
      %632 = vmatprep.subr.mxu0 0.0
      %633 = vmatpush2.msra.mxu0 0.0
      %634 = vmatprep.subr.mxu0 0.0
      %635 = vmatpush2.msra.mxu0 0.0
      %636 = vmatprep.subr.mxu0 0.0
      %637 = vmatpush2.msra.mxu0 0.0
      %638 = vmatprep.subr.mxu0 0.0
      %639 = vmatpush2.msra.mxu0 0.0
      %640 = vmatprep.subr.mxu0 0.0
      %641 = vmatpush2.msra.mxu0 0.0
      %642 = vmatprep.subr.mxu0 0.0
      %643 = vmatpush2.msra.mxu0 0.0
      %644 = vmatprep.subr.mxu0 0.0
      %645 = vmatpush2.msra.mxu0 0.0
      %646 = vmatprep.subr.mxu0 0.0
      %647 = vmatpush2.msra.mxu0 0.0
      %648 = vmatprep.subr.mxu0 0.0
      %649 = vmatpush2.msra.mxu0 0.0
      %650 = vmatprep.mubr.f32.mxu0 0.0
      %651 = vmatmul.mubr.f32.gmra.mxu0 %v584
      %v652 = vpop.f32.mrf.mxu0
      %v653 = vadd.f32 0.0, %v652
      %v654 = vpop.f32.mrf.mxu0
      %655 = vdwg.mxu0
      %v656 = vadd.f32 %v578, %v653
      %657 = vst.msk [vmem:[%s571] sm:$0xff] %vm284, %v656
      %658 = vst.msk [vmem:[%s546] sm:$0xff] %vm383, %v551
      %659 = vrot.lane.b32.xlu0 %v281, 112
      %v660 = vpop.permute.xlu0 %659
      %661 = vrot.lane.b32.xlu0 %v282, 112
      %v662 = vpop.permute.xlu0 %661
      %v663 = vsel %vm284, %v660, 0
      %v665 = vsel %vm284, %v662, 0
      %667 = vmatprep.subr.mxu0 0.0
      %668 = vmatpush1.xpose.msra.mxu0 0.0
      %669 = vmatprep.subr.mxu0 0.0
      %670 = vmatpush1.xpose.msra.mxu0 0.0
      %671 = vmatprep.subr.mxu0 0.0
      %672 = vmatpush1.xpose.msra.mxu0 0.0
      %673 = vmatprep.subr.mxu0 0.0
      %674 = vmatpush1.xpose.msra.mxu0 0.0
      %675 = vmatprep.subr.mxu0 0.0
      %676 = vmatpush1.xpose.msra.mxu0 0.0
      %677 = vmatprep.subr.mxu0 0.0
      %678 = vmatpush1.xpose.msra.mxu0 0.0
      %679 = vmatprep.subr.mxu0 0.0
      %680 = vmatpush1.xpose.msra.mxu0 0.0
      %681 = vmatprep.subr.mxu0 0.0
      %682 = vmatpush1.xpose.msra.mxu0 0.0
      %683 = vmatprep.subr.mxu0 0.0
      %684 = vmatpush1.xpose.msra.mxu0 0.0
      %685 = vmatprep.subr.mxu0 0.0
      %686 = vmatpush1.xpose.msra.mxu0 0.0
      %687 = vmatprep.subr.mxu0 0.0
      %688 = vmatpush1.xpose.msra.mxu0 0.0
      %689 = vmatprep.subr.mxu0 0.0
      %690 = vmatpush1.xpose.msra.mxu0 0.0
      %691 = vmatprep.subr.mxu0 0.0
      %692 = vmatpush1.xpose.msra.mxu0 0.0
      %693 = vmatprep.subr.mxu0 0.0
      %694 = vmatpush1.xpose.msra.mxu0 0.0
      %695 = vmatprep.subr.mxu0 0.0
      %696 = vmatpush1.xpose.msra.mxu0 0.0
      %697 = vmatprep.subr.mxu0 0.0
      %698 = vmatpush1.xpose.msra.mxu0 %v665
      %699 = vmatprep.subr.mxu0 0.0
      %700 = vmatpush2.xpose.msra.mxu0 0.0
      %701 = vmatprep.subr.mxu0 0.0
      %702 = vmatpush2.xpose.msra.mxu0 0.0
      %703 = vmatprep.subr.mxu0 0.0
      %704 = vmatpush2.xpose.msra.mxu0 0.0
      %705 = vmatprep.subr.mxu0 0.0
      %706 = vmatpush2.xpose.msra.mxu0 0.0
      %707 = vmatprep.subr.mxu0 0.0
      %708 = vmatpush2.xpose.msra.mxu0 0.0
      %709 = vmatprep.subr.mxu0 0.0
      %710 = vmatpush2.xpose.msra.mxu0 0.0
      %711 = vmatprep.subr.mxu0 0.0
      %712 = vmatpush2.xpose.msra.mxu0 0.0
      %713 = vmatprep.subr.mxu0 0.0
      %714 = vmatpush2.xpose.msra.mxu0 0.0
      %715 = vmatprep.subr.mxu0 0.0
      %716 = vmatpush2.xpose.msra.mxu0 0.0
      %717 = vmatprep.subr.mxu0 0.0
      %718 = vmatpush2.xpose.msra.mxu0 0.0
      %719 = vmatprep.subr.mxu0 0.0
      %720 = vmatpush2.xpose.msra.mxu0 0.0
      %721 = vmatprep.subr.mxu0 0.0
      %722 = vmatpush2.xpose.msra.mxu0 0.0
      %723 = vmatprep.subr.mxu0 0.0
      %724 = vmatpush2.xpose.msra.mxu0 0.0
      %725 = vmatprep.subr.mxu0 0.0
      %726 = vmatpush2.xpose.msra.mxu0 0.0
      %727 = vmatprep.subr.mxu0 0.0
      %728 = vmatpush2.xpose.msra.mxu0 0.0
      %729 = vmatprep.subr.mxu0 0.0
      %730 = vmatpush2.xpose.msra.mxu0 0.0
      %731 = vmatprep.mubr.f32.mxu0 0.0
      %732 = vmatmul.mubr.f32.gmra.mxu0 %v663
      %v733 = vpop.f32.mrf.mxu0
      %v734 = vadd.f32 0.0, %v733
      %v735 = vpop.f32.mrf.mxu0
      %736 = vdwg.mxu0
      %s737 = scalar_lea.vmem [#allocation2], 16
      %v738 = vld [vmem:[%s737] sm:$0xff]
      %v739 = vsel %vm284, %v734, -inf
      %740 = vmax.xlane.f32.xlu0 %v739
      %v741 = vpop.xlane.xlu0 %740
      %v742 = vmax.f32 %v738, %v741
      %v743 = vsub.f32 %v738, %v742
      %v744 = vmul.f32 %v743, 1.442695
      %v745 = vpow.pop %v744
      %747 = vset.pattern.permute.xlu0 0
      %748 = vperm.xlu0 %747, %v742
      %v749 = vpop.permute.xlu0 %748
      %v751 = vsub.f32 %v734, %v749
      %v752 = vmul.f32 %v751, 1.442695
      %v753 = vpow.pop %v752
      %s754 = scalar_lea.vmem [#allocation3], 16
      %v755 = vld [vmem:[%s754] sm:$0xff]
      %v756 = vmul.f32 %v745, %v755
      %v757 = vsel %vm284, %v753, 0.0
      %758 = vadd.xlane.f32.xlu0 %v757
      %v759 = vpop.xlane.xlu0 %758
      %v760 = vadd.f32 %v756, %v759
      %761 = vst.msk [vmem:[%s754] sm:$0xff] %vm383, %v760
      %s762 = scalar_lea.vmem [#allocation4], 16
      %v763 = vld [vmem:[%s762] sm:$0xff]
      %765 = vset.pattern.permute.xlu0 0
      %766 = vperm.xlu0 %765, %v745
      %v767 = vpop.permute.xlu0 %766
      %v769 = vmul.f32 %v767, %v763
      %770 = vrot.lane.b32.xlu0 %v283, 112
      %v771 = vpop.permute.xlu0 %770
      %v774 = vsel %vm284, %v753, 0
      %776 = vmatprep.subr.mxu0 0.0
      %777 = vmatpush1.msra.mxu0 0.0
      %778 = vmatprep.subr.mxu0 0.0
      %779 = vmatpush1.msra.mxu0 0.0
      %780 = vmatprep.subr.mxu0 0.0
      %781 = vmatpush1.msra.mxu0 0.0
      %782 = vmatprep.subr.mxu0 0.0
      %783 = vmatpush1.msra.mxu0 0.0
      %784 = vmatprep.subr.mxu0 0.0
      %785 = vmatpush1.msra.mxu0 0.0
      %786 = vmatprep.subr.mxu0 0.0
      %787 = vmatpush1.msra.mxu0 0.0
      %788 = vmatprep.subr.mxu0 0.0
      %789 = vmatpush1.msra.mxu0 0.0
      %790 = vmatprep.subr.mxu0 0.0
      %791 = vmatpush1.msra.mxu0 0.0
      %792 = vmatprep.subr.mxu0 0.0
      %793 = vmatpush1.msra.mxu0 0.0
      %794 = vmatprep.subr.mxu0 0.0
      %795 = vmatpush1.msra.mxu0 0.0
      %796 = vmatprep.subr.mxu0 0.0
      %797 = vmatpush1.msra.mxu0 0.0
      %798 = vmatprep.subr.mxu0 0.0
      %799 = vmatpush1.msra.mxu0 0.0
      %800 = vmatprep.subr.mxu0 0.0
      %801 = vmatpush1.msra.mxu0 0.0
      %802 = vmatprep.subr.mxu0 0.0
      %803 = vmatpush1.msra.mxu0 0.0
      %804 = vmatprep.subr.mxu0 0.0
      %805 = vmatpush1.msra.mxu0 0.0
      %806 = vmatprep.subr.mxu0 0.0
      %807 = vmatpush1.msra.mxu0 %v771
      %808 = vmatprep.subr.mxu0 0.0
      %809 = vmatpush2.msra.mxu0 0.0
      %810 = vmatprep.subr.mxu0 0.0
      %811 = vmatpush2.msra.mxu0 0.0
      %812 = vmatprep.subr.mxu0 0.0
      %813 = vmatpush2.msra.mxu0 0.0
      %814 = vmatprep.subr.mxu0 0.0
      %815 = vmatpush2.msra.mxu0 0.0
      %816 = vmatprep.subr.mxu0 0.0
      %817 = vmatpush2.msra.mxu0 0.0
      %818 = vmatprep.subr.mxu0 0.0
      %819 = vmatpush2.msra.mxu0 0.0
      %820 = vmatprep.subr.mxu0 0.0
      %821 = vmatpush2.msra.mxu0 0.0
      %822 = vmatprep.subr.mxu0 0.0
      %823 = vmatpush2.msra.mxu0 0.0
      %824 = vmatprep.subr.mxu0 0.0
      %825 = vmatpush2.msra.mxu0 0.0
      %826 = vmatprep.subr.mxu0 0.0
      %827 = vmatpush2.msra.mxu0 0.0
      %828 = vmatprep.subr.mxu0 0.0
      %829 = vmatpush2.msra.mxu0 0.0
      %830 = vmatprep.subr.mxu0 0.0
      %831 = vmatpush2.msra.mxu0 0.0
      %832 = vmatprep.subr.mxu0 0.0
      %833 = vmatpush2.msra.mxu0 0.0
      %834 = vmatprep.subr.mxu0 0.0
      %835 = vmatpush2.msra.mxu0 0.0
      %836 = vmatprep.subr.mxu0 0.0
      %837 = vmatpush2.msra.mxu0 0.0
      %838 = vmatprep.subr.mxu0 0.0
      %839 = vmatpush2.msra.mxu0 0.0
      %840 = vmatprep.mubr.f32.mxu0 0.0
      %841 = vmatmul.mubr.f32.gmra.mxu0 %v774
      %v842 = vpop.f32.mrf.mxu0
      %v843 = vadd.f32 0.0, %v842
      %v844 = vpop.f32.mrf.mxu0
      %845 = vdwg.mxu0
      %v846 = vadd.f32 %v769, %v843
      %847 = vst.msk [vmem:[%s762] sm:$0xff] %vm284, %v846
      %848 = vst.msk [vmem:[%s737] sm:$0xff] %vm383, %v742
      %849 = vrot.lane.b32.xlu0 %v281, 104
      %v850 = vpop.permute.xlu0 %849
      %851 = vrot.lane.b32.xlu0 %v282, 104
      %v852 = vpop.permute.xlu0 %851
      %v853 = vsel %vm284, %v850, 0
      %v855 = vsel %vm284, %v852, 0
      %857 = vmatprep.subr.mxu0 0.0
      %858 = vmatpush1.xpose.msra.mxu0 0.0
      %859 = vmatprep.subr.mxu0 0.0
      %860 = vmatpush1.xpose.msra.mxu0 0.0
      %861 = vmatprep.subr.mxu0 0.0
      %862 = vmatpush1.xpose.msra.mxu0 0.0
      %863 = vmatprep.subr.mxu0 0.0
      %864 = vmatpush1.xpose.msra.mxu0 0.0
      %865 = vmatprep.subr.mxu0 0.0
      %866 = vmatpush1.xpose.msra.mxu0 0.0
      %867 = vmatprep.subr.mxu0 0.0
      %868 = vmatpush1.xpose.msra.mxu0 0.0
      %869 = vmatprep.subr.mxu0 0.0
      %870 = vmatpush1.xpose.msra.mxu0 0.0
      %871 = vmatprep.subr.mxu0 0.0
      %872 = vmatpush1.xpose.msra.mxu0 0.0
      %873 = vmatprep.subr.mxu0 0.0
      %874 = vmatpush1.xpose.msra.mxu0 0.0
      %875 = vmatprep.subr.mxu0 0.0
      %876 = vmatpush1.xpose.msra.mxu0 0.0
      %877 = vmatprep.subr.mxu0 0.0
      %878 = vmatpush1.xpose.msra.mxu0 0.0
      %879 = vmatprep.subr.mxu0 0.0
      %880 = vmatpush1.xpose.msra.mxu0 0.0
      %881 = vmatprep.subr.mxu0 0.0
      %882 = vmatpush1.xpose.msra.mxu0 0.0
      %883 = vmatprep.subr.mxu0 0.0
      %884 = vmatpush1.xpose.msra.mxu0 0.0
      %885 = vmatprep.subr.mxu0 0.0
      %886 = vmatpush1.xpose.msra.mxu0 0.0
      %887 = vmatprep.subr.mxu0 0.0
      %888 = vmatpush1.xpose.msra.mxu0 %v855
      %889 = vmatprep.subr.mxu0 0.0
      %890 = vmatpush2.xpose.msra.mxu0 0.0
      %891 = vmatprep.subr.mxu0 0.0
      %892 = vmatpush2.xpose.msra.mxu0 0.0
      %893 = vmatprep.subr.mxu0 0.0
      %894 = vmatpush2.xpose.msra.mxu0 0.0
      %895 = vmatprep.subr.mxu0 0.0
      %896 = vmatpush2.xpose.msra.mxu0 0.0
      %897 = vmatprep.subr.mxu0 0.0
      %898 = vmatpush2.xpose.msra.mxu0 0.0
      %899 = vmatprep.subr.mxu0 0.0
      %900 = vmatpush2.xpose.msra.mxu0 0.0
      %901 = vmatprep.subr.mxu0 0.0
      %902 = vmatpush2.xpose.msra.mxu0 0.0
      %903 = vmatprep.subr.mxu0 0.0
      %904 = vmatpush2.xpose.msra.mxu0 0.0
      %905 = vmatprep.subr.mxu0 0.0
      %906 = vmatpush2.xpose.msra.mxu0 0.0
      %907 = vmatprep.subr.mxu0 0.0
      %908 = vmatpush2.xpose.msra.mxu0 0.0
      %909 = vmatprep.subr.mxu0 0.0
      %910 = vmatpush2.xpose.msra.mxu0 0.0
      %911 = vmatprep.subr.mxu0 0.0
      %912 = vmatpush2.xpose.msra.mxu0 0.0
      %913 = vmatprep.subr.mxu0 0.0
      %914 = vmatpush2.xpose.msra.mxu0 0.0
      %915 = vmatprep.subr.mxu0 0.0
      %916 = vmatpush2.xpose.msra.mxu0 0.0
      %917 = vmatprep.subr.mxu0 0.0
      %918 = vmatpush2.xpose.msra.mxu0 0.0
      %919 = vmatprep.subr.mxu0 0.0
      %920 = vmatpush2.xpose.msra.mxu0 0.0
      %921 = vmatprep.mubr.f32.mxu0 0.0
      %922 = vmatmul.mubr.f32.gmra.mxu0 %v853
      %v923 = vpop.f32.mrf.mxu0
      %v924 = vadd.f32 0.0, %v923
      %v925 = vpop.f32.mrf.mxu0
      %926 = vdwg.mxu0
      %s927 = scalar_lea.vmem [#allocation2], 24
      %v928 = vld [vmem:[%s927] sm:$0xff]
      %v929 = vsel %vm284, %v924, -inf
      %930 = vmax.xlane.f32.xlu0 %v929
      %v931 = vpop.xlane.xlu0 %930
      %v932 = vmax.f32 %v928, %v931
      %v933 = vsub.f32 %v928, %v932
      %v934 = vmul.f32 %v933, 1.442695
      %v935 = vpow.pop %v934
      %937 = vset.pattern.permute.xlu0 0
      %938 = vperm.xlu0 %937, %v932
      %v939 = vpop.permute.xlu0 %938
      %v941 = vsub.f32 %v924, %v939
      %v942 = vmul.f32 %v941, 1.442695
      %v943 = vpow.pop %v942
      %s944 = scalar_lea.vmem [#allocation3], 24
      %v945 = vld [vmem:[%s944] sm:$0xff]
      %v946 = vmul.f32 %v935, %v945
      %v947 = vsel %vm284, %v943, 0.0
      %948 = vadd.xlane.f32.xlu0 %v947
      %v949 = vpop.xlane.xlu0 %948
      %v950 = vadd.f32 %v946, %v949
      %951 = vst.msk [vmem:[%s944] sm:$0xff] %vm383, %v950
      %s952 = scalar_lea.vmem [#allocation4], 24
      %v953 = vld [vmem:[%s952] sm:$0xff]
      %955 = vset.pattern.permute.xlu0 0
      %956 = vperm.xlu0 %955, %v935
      %v957 = vpop.permute.xlu0 %956
      %v959 = vmul.f32 %v957, %v953
      %960 = vrot.lane.b32.xlu0 %v283, 104
      %v961 = vpop.permute.xlu0 %960
      %v964 = vsel %vm284, %v943, 0
      %966 = vmatprep.subr.mxu0 0.0
      %967 = vmatpush1.msra.mxu0 0.0
      %968 = vmatprep.subr.mxu0 0.0
      %969 = vmatpush1.msra.mxu0 0.0
      %970 = vmatprep.subr.mxu0 0.0
      %971 = vmatpush1.msra.mxu0 0.0
      %972 = vmatprep.subr.mxu0 0.0
      %973 = vmatpush1.msra.mxu0 0.0
      %974 = vmatprep.subr.mxu0 0.0
      %975 = vmatpush1.msra.mxu0 0.0
      %976 = vmatprep.subr.mxu0 0.0
      %977 = vmatpush1.msra.mxu0 0.0
      %978 = vmatprep.subr.mxu0 0.0
      %979 = vmatpush1.msra.mxu0 0.0
      %980 = vmatprep.subr.mxu0 0.0
      %981 = vmatpush1.msra.mxu0 0.0
      %982 = vmatprep.subr.mxu0 0.0
      %983 = vmatpush1.msra.mxu0 0.0
      %984 = vmatprep.subr.mxu0 0.0
      %985 = vmatpush1.msra.mxu0 0.0
      %986 = vmatprep.subr.mxu0 0.0
      %987 = vmatpush1.msra.mxu0 0.0
      %988 = vmatprep.subr.mxu0 0.0
      %989 = vmatpush1.msra.mxu0 0.0
      %990 = vmatprep.subr.mxu0 0.0
      %991 = vmatpush1.msra.mxu0 0.0
      %992 = vmatprep.subr.mxu0 0.0
      %993 = vmatpush1.msra.mxu0 0.0
      %994 = vmatprep.subr.mxu0 0.0
      %995 = vmatpush1.msra.mxu0 0.0
      %996 = vmatprep.subr.mxu0 0.0
      %997 = vmatpush1.msra.mxu0 %v961
      %998 = vmatprep.subr.mxu0 0.0
      %999 = vmatpush2.msra.mxu0 0.0
      %1000 = vmatprep.subr.mxu0 0.0
      %1001 = vmatpush2.msra.mxu0 0.0
      %1002 = vmatprep.subr.mxu0 0.0
      %1003 = vmatpush2.msra.mxu0 0.0
      %1004 = vmatprep.subr.mxu0 0.0
      %1005 = vmatpush2.msra.mxu0 0.0
      %1006 = vmatprep.subr.mxu0 0.0
      %1007 = vmatpush2.msra.mxu0 0.0
      %1008 = vmatprep.subr.mxu0 0.0
      %1009 = vmatpush2.msra.mxu0 0.0
      %1010 = vmatprep.subr.mxu0 0.0
      %1011 = vmatpush2.msra.mxu0 0.0
      %1012 = vmatprep.subr.mxu0 0.0
      %1013 = vmatpush2.msra.mxu0 0.0
      %1014 = vmatprep.subr.mxu0 0.0
      %1015 = vmatpush2.msra.mxu0 0.0
      %1016 = vmatprep.subr.mxu0 0.0
      %1017 = vmatpush2.msra.mxu0 0.0
      %1018 = vmatprep.subr.mxu0 0.0
      %1019 = vmatpush2.msra.mxu0 0.0
      %1020 = vmatprep.subr.mxu0 0.0
      %1021 = vmatpush2.msra.mxu0 0.0
      %1022 = vmatprep.subr.mxu0 0.0
      %1023 = vmatpush2.msra.mxu0 0.0
      %1024 = vmatprep.subr.mxu0 0.0
      %1025 = vmatpush2.msra.mxu0 0.0
      %1026 = vmatprep.subr.mxu0 0.0
      %1027 = vmatpush2.msra.mxu0 0.0
      %1028 = vmatprep.subr.mxu0 0.0
      %1029 = vmatpush2.msra.mxu0 0.0
      %1030 = vmatprep.mubr.f32.mxu0 0.0
      %1031 = vmatmul.mubr.f32.gmra.mxu0 %v964
      %v1032 = vpop.f32.mrf.mxu0
      %v1033 = vadd.f32 0.0, %v1032
      %v1034 = vpop.f32.mrf.mxu0
      %1035 = vdwg.mxu0
      %v1036 = vadd.f32 %v959, %v1033
      %1037 = vst.msk [vmem:[%s952] sm:$0xff] %vm284, %v1036
      %1038 = vst.msk [vmem:[%s927] sm:$0xff] %vm383, %v932
      // Predicated region
      $region37: #{mha_self_forward.4} parent=31 // pred_check
        %p1039 = pneg %p262
      $region38: #{mha_self_forward.4} parent=31 // pred_check_branch
        %1041 = sbr.rel (%p1039) target = $region40
      $region39: #{mha_self_forward.4} parent=31 // pred_region
        %v1042 = vld [vmem:[#allocation3] sm:$0xff]
        %v1043 = vrcp.pop %v1042
        %v1044 = vld [vmem:[#allocation4] sm:$0xff]
        %1046 = vset.pattern.permute.xlu0 0
        %1047 = vperm.xlu0 %1046, %v1043
        %v1048 = vpop.permute.xlu0 %1047
        %v1050 = vmul.f32 %v1044, %v1048
        %1051 = vst.msk [vmem:[%s261] sm:$0xff] %vm284, %v1050
        %v1052 = vld [vmem:[%s563] sm:$0xff]
        %v1053 = vrcp.pop %v1052
        %v1054 = vld [vmem:[%s571] sm:$0xff]
        %1056 = vset.pattern.permute.xlu0 0
        %1057 = vperm.xlu0 %1056, %v1053
        %v1058 = vpop.permute.xlu0 %1057
        %v1060 = vmul.f32 %v1054, %v1058
        %s1061 = scalar_lea.vmem %s261, 8
        %1062 = vst.msk [vmem:[%s1061] sm:$0xff] %vm284, %v1060
        %v1063 = vld [vmem:[%s754] sm:$0xff]
        %v1064 = vrcp.pop %v1063
        %v1065 = vld [vmem:[%s762] sm:$0xff]
        %1067 = vset.pattern.permute.xlu0 0
        %1068 = vperm.xlu0 %1067, %v1064
        %v1069 = vpop.permute.xlu0 %1068
        %v1071 = vmul.f32 %v1065, %v1069
        %s1072 = scalar_lea.vmem %s261, 16
        %1073 = vst.msk [vmem:[%s1072] sm:$0xff] %vm284, %v1071
        %v1074 = vld [vmem:[%s944] sm:$0xff]
        %v1075 = vrcp.pop %v1074
        %v1076 = vld [vmem:[%s952] sm:$0xff]
        %1078 = vset.pattern.permute.xlu0 0
        %1079 = vperm.xlu0 %1078, %v1075
        %v1080 = vpop.permute.xlu0 %1079
        %v1082 = vmul.f32 %v1076, %v1080
        %s1083 = scalar_lea.vmem %s261, 24
        %1084 = vst.msk [vmem:[%s1083] sm:$0xff] %vm284, %v1082
      $region40: #{mha_self_forward.4} parent=31 // pred_fallthru
        _
      %p1085 = scmp.lt.s32.totalorder %s19, 1
      %s1086 = scalar_select %p1085, %s19, 1
      %p1087 = scmp.lt.s32.totalorder %s20, 0
      %s1088 = scalar_select %p1087, %s20, 0
      %s1089 = smul.addr %s1086, 4
      %s1090 = sadd.s32 %s1088, %s1089
      %s1091 = smul.addr %s1090, 8
      %s1092 = scalar_lea.vmem %s3, %s1091
      // Predicated region
      $region41: #{mha_self_forward.4} parent=31 // pred_check
        %p1093 = pneg %p137
      $region42: #{mha_self_forward.4} parent=31 // pred_check_branch
        %1095 = sbr.rel (%p1093) target = $region44
      $region43: #{mha_self_forward.4} parent=31 // pred_region
        _
      $region44: #{mha_self_forward.4} parent=31 // pred_fallthru
        _
    $region32: #{mha_self_forward.4} parent=5 // pred_fallthru
      _
    %p1096 = scmp.le.s32.totalorder 2, %s9
    // Predicated region
    $region45: #{mha_self_forward.4} parent=5 // pred_check
      %p1097 = pneg %p1096
    $region46: #{mha_self_forward.4} parent=5 // pred_check_branch
      %1099 = sbr.rel (%p1097) target = $region48
    $region47: #{mha_self_forward.4} parent=5 // pred_region
      %s1100 = ssub.s32 %s9, 2
      // Predicated region
      $region49: #{mha_self_forward.4} parent=47 // pred_check
        %p1101 = pneg %p143
      $region50: #{mha_self_forward.4} parent=47 // pred_check_branch
        %1103 = sbr.rel (%p1101) target = $region52
      $region51: #{mha_self_forward.4} parent=47 // pred_region
        %p1104 = scmp.lt.s32.totalorder %s22, 1
        %s1105 = scalar_select %p1104, %s22, 1
        %p1106 = scmp.lt.s32.totalorder %s23, 0
        %s1107 = scalar_select %p1106, %s23, 0
        %s1108 = smul.addr %s1105, 4
        %s1109 = sadd.s32 %s1107, %s1108
        %s1110 = smul.addr %s1109, 8
        %s1111 = scalar_lea.vmem %s3, %s1110
      $region52: #{mha_self_forward.4} parent=47 // pred_fallthru
        _
    $region48: #{mha_self_forward.4} parent=5 // pred_fallthru
      _
  $region6: #{mha_self_forward.4} parent=0 // loop_footer
    %s13 = sadd.s32 1, %s9
  $region7: #{mha_self_forward.4} parent=0 // loop_footer_branch
    %8 = sbr.rel target = $region3
  $region8: #{mha_self_forward.4} parent=0 // loop_exit
    _

</llo_original>
